<compile_context>
chip_gen: v7x
topology: tpu7x:2x2x1
jax: 0.10.0
libtpu: 0.0.40
codegen_flags: <defaults>
</compile_context>

<pallas_src>
import functools

import jax
import jax.numpy as jnp
import numpy as np
from jax.experimental import pallas as pl
from jax.experimental.pallas import tpu as pltpu

# ---- GbROptim hyper-parameters (defaults from __init__; num_classes shrunk) ----
NUM_CLASSES = 127            # -> n_c = 128 (1203 in the real module)
LOSS_WEIGHT = 1.0            # self.loss_weight
WARM_UP_ITER = 8000
UPPER_BOUND = 5.0
LOWER_BOUND = 1.0 / 3.0
BETA_SUP = 0.5
GAMMA = 1.0
FOCAL = True
EMA_FACTOR = 0.999
SAVE_ITER = 1000
INTERVAL = 64                # row-chunk size used by collect_grad_optim

LANE = 128
CORR_IN_BF16 = True          # bf16 operands for the (C,C) MXU matmul, f32 accumulate


# ------------------------- hardware-aware tiling ------------------------------
def _tpu_vmem_bytes():
    try:
        return int(pltpu.get_tpu_info().vmem_capacity_bytes)
    except Exception:
        return 64 * 1024 * 1024          # conservative fallback (v7x per-TC VMEM)


def _num_core_splits():
    """2 for multi-TensorCore (megacore) chips, 1 for single-TC v5e/v6e."""
    try:
        kind = jax.devices()[0].device_kind.lower()
    except Exception:
        return 1
    if any(t in kind for t in ("lite", "v5e", "v6e", "v6")):
        return 1
    if any(t in kind for t in ("v7", "7x", "v4", "v5p")):
        return 2
    return 1


def _tile_vmem_bytes(tm, c, in_itemsize):
    # double-buffered input tiles + live (TM,C) temporaries + resident accumulators
    tile_in = 2 * (tm * c * in_itemsize + 2 * (tm * 4) + c * 4)
    tile_tmp = 6 * tm * c * 4 + 2 * tm * c * 2     # f32 temps + bf16 matmul operands
    accum = 2 * (c * c * 4 + c * 4 + tm * 2 * 4)   # (C,C) corr, (1,C) pos, (TM,2) rows
    return tile_in + tile_tmp + accum


def _pick_tm(n, c, splits, in_itemsize):
    """Largest row tile (128..512) whose footprint fits ~half of this chip's
    VMEM, leaving a few tiles per core so the logit DMA overlaps compute."""
    budget = _tpu_vmem_bytes() // 2
    tm = 128
    for cand in (512, 256, 128):
        if n >= splits * cand and _tile_vmem_bytes(cand, c, in_itemsize) <= budget:
            tm = cand
            break
    while tm > 128 and pl.cdiv(n, splits * tm) < 3:
        tm //= 2
    return tm


# ----------------------------- Pallas kernel ---------------------------------
def _gbr_kernel(x_ref, lab_ref, w_ref, cwb_ref,
                rows_ref, pos_ref, corr_ref,
                *, gamma, focal, m_cut, tiles_per_core, corr_bf16):
    core = pl.program_id(0)      # TensorCore split ("parallel")
    i = pl.program_id(1)         # row-tile axis ("arbitrary", accumulation)

    x = x_ref[...].astype(jnp.float32)   # (TM, C); logits stream in native dtype
    lab = lab_ref[...]                   # (TM, 1) int32 labels
    w = w_ref[...]                       # (TM, 1) f32 raw per-row weight (self.weight)
    cwb = cwb_ref[...]                   # (1,  C) class_weights ** beta

    tm, c = x.shape
    one_hot = jax.lax.broadcasted_iota(jnp.int32, (tm, c), 1) == lab    # (TM, C)

    # --- softmax pieces (shared by the loss and collect_grad paths) ---
    x_max = jnp.max(x, axis=-1, keepdims=True)
    ex = jnp.exp(x - x_max)
    sum_ex = jnp.sum(ex, axis=-1, keepdims=True)
    lse = jnp.log(sum_ex) + x_max
    inv_sum = pl.reciprocal(sum_ex, approx=True)     # TM EUP recips, not TMxC divides
    prob = ex * inv_sum + 1e-5                       # (TM, C) -> corr matmul RHS

    # --- per-row cross entropy + focal loss ---
    logit_lab = jnp.sum(jnp.where(one_hot, x, 0.0), axis=-1, keepdims=True)
    ce = lse - logit_lab                             # (TM, 1)
    p = jnp.exp(-ce)                                 # softmax prob at the label
    if focal:
        if gamma == 1.0:
            loss_row = (1.0 - p) * ce
        else:
            loss_row = (1.0 - p) ** gamma * ce
    else:
        loss_row = ce

    # --- get_weight gather: class_weights^beta at the label column ---
    tmpw_row = jnp.sum(jnp.where(one_hot, cwb, 0.0), axis=-1, keepdims=True)

    # merged per-row output tile: column 0 = loss, column 1 = tmp_weight
    col = jax.lax.broadcasted_iota(jnp.int32, (tm, 2), 1)
    rows_ref[...] = jnp.where(col == 0, loss_row, tmpw_row)

    # --- collect_grad_optim hot path: only the label column of fg survives ---
    prob_lab = p + 1e-5                              # (TM, 1)
    if focal:
        fg_lab = w * ((1.0 - prob_lab) / prob_lab - jnp.log(prob_lab))
    else:
        fg_lab = w / prob_lab
    pos_row = (1.0 - prob_lab) * prob_lab * fg_lab   # (TM, 1)
    pos_c = jnp.sum(jnp.where(one_hot, pos_row, 0.0), axis=0, keepdims=True)

    # rows >= m_cut are the 64-chunk remainder, dropped from corr in the ref
    row = (core * tiles_per_core + i) * tm + jax.lax.broadcasted_iota(
        jnp.int32, (tm, 1), 0)
    mcorr = (row < m_cut).astype(jnp.float32)        # (TM, 1)
    a_row = prob_lab * fg_lab * mcorr                # (TM, 1)
    a = jnp.where(one_hot, a_row, 0.0)               # (TM, C)
    if corr_bf16:
        a = a.astype(jnp.bfloat16)                   # bf16 operands -> native MXU,
        rhs = prob.astype(jnp.bfloat16)              # f32 accumulation below
    else:
        rhs = prob
    # corr[j, k] = sum_n a[n, j] * prob[n, k]  (contract over rows -> MXU)
    corr_c = jax.lax.dot_general(a, rhs, (((0,), (0,)), ((), ())),
                                 preferred_element_type=jnp.float32)   # (C, C)

    @pl.when(i == 0)
    def _():
        pos_ref[...] = jnp.zeros_like(pos_ref)
        corr_ref[...] = jnp.zeros_like(corr_ref)

    pos_ref[...] += pos_c
    corr_ref[...] += corr_c


def _run_pallas(cls_pad, lab_pad, w_pad, cwb_pad, *, m_cut, tm, splits,
                tiles_per_core):
    n_pad, c_pad = cls_pad.shape
    kernel = functools.partial(
        _gbr_kernel, gamma=GAMMA, focal=FOCAL, m_cut=m_cut,
        tiles_per_core=tiles_per_core, corr_bf16=CORR_IN_BF16)

    out_shape = (
        jax.ShapeDtypeStruct((n_pad, 2), jnp.float32),              # [loss | tmpw]
        jax.ShapeDtypeStruct((splits, 1, c_pad), jnp.float32),      # pos partials
        jax.ShapeDtypeStruct((splits, c_pad, c_pad), jnp.float32),  # corr partials
    )
    row_map = lambda core, i: (core * tiles_per_core + i, 0)
    grid_spec = pltpu.PrefetchScalarGridSpec(
        num_scalar_prefetch=0,
        grid=(splits, tiles_per_core),
        in_specs=[
            pl.BlockSpec((tm, c_pad), row_map),
            pl.BlockSpec((tm, 1), row_map),
            pl.BlockSpec((tm, 1), row_map),
            pl.BlockSpec((1, c_pad), lambda core, i: (0, 0)),
        ],
        out_specs=(
            pl.BlockSpec((tm, 2), row_map),
            pl.BlockSpec((None, 1, c_pad), lambda core, i: (core, 0, 0)),
            pl.BlockSpec((None, c_pad, c_pad), lambda core, i: (core, 0, 0)),
        ),
    )
    vmem_limit = _tile_vmem_bytes(tm, c_pad, cls_pad.dtype.itemsize)
    vmem_limit = int(min(max(int(vmem_limit * 1.3), 16 * 1024 * 1024),
                         int(_tpu_vmem_bytes() * 0.9)))
    rows, pos_part, corr_part = pl.pallas_call(
        kernel,
        out_shape=out_shape,
        grid_spec=grid_spec,
        compiler_params=pltpu.CompilerParams(
            # TODO(synk): on v7x, confirm both TensorCores actually run the leading
            # axis in parallel (profile); switch to pltpu.CORE_PARALLEL / pl.core_map
            # if the plain "parallel" semantics do not shard it.
            dimension_semantics=("parallel", "arbitrary"),
            vmem_limit_bytes=vmem_limit),
    )(cls_pad, lab_pad, w_pad, cwb_pad)
    pos_sum = jnp.sum(pos_part, axis=0)[0]            # (C_pad,)
    corr_sum = jnp.sum(corr_part, axis=0)             # (C_pad, C_pad)
    return rows[:, 0], rows[:, 1], pos_sum, corr_sum


# -------------------- pure-JAX reference of the kernel body ------------------
def _ref_blocks(cls32, lab, w, cw_beta, *, m_cut):
    n, c = cls32.shape
    t = jax.nn.one_hot(lab, c, dtype=jnp.float32)
    mcorr = (jnp.arange(n) < m_cut).astype(jnp.float32)[:, None]
    lse = jax.scipy.special.logsumexp(cls32, axis=-1, keepdims=True)
    ce = lse - jnp.sum(t * cls32, axis=-1, keepdims=True)
    if FOCAL:
        p = jnp.exp(-ce)
        loss_row = (1.0 - p) ** GAMMA * ce
    else:
        loss_row = ce
    tmpw = jnp.sum(cw_beta[None, :] * t, axis=-1)
    prob = jax.nn.softmax(cls32, axis=-1) + 1e-5
    if FOCAL:
        fg = w[:, None] * ((1.0 - prob) / prob - jnp.log(prob))
    else:
        fg = w[:, None] * (1.0 / prob)
    pos = jnp.sum(t * (1.0 - prob) * prob * fg, axis=0)
    a = prob * fg * t * mcorr
    corr = jnp.einsum("nj,nk->jk", a, prob, precision=jax.lax.Precision.HIGHEST)
    return loss_row[:, 0], tmpw, pos, corr


# ------------------------------ forward wrapper -------------------------------
def gbr_forward(cls_score, label, weight, state, *, iter_, loss_type=1,
                loss_weight=1.0, use_pallas=True):
    n, c = cls_score.shape
    assert c == NUM_CLASSES + 1
    beta = 1.0 if loss_type == 1 else BETA_SUP

    # ---- get_weight: state handling (glue); per-row gather runs in-kernel ----
    class_weights = state["class_weights"]
    if iter_ >= 0:
        # TODO(synk): checkpoint dumping at iter % save_iter == 0 (torch.save) skipped.
        if iter_ % SAVE_ITER == 0 and iter_ >= WARM_UP_ITER:
            class_weights = jax.nn.softmax(state["classes_logits"]) * c
        class_weights = jnp.clip(class_weights, LOWER_BOUND, UPPER_BOUND)
        cw_beta = (class_weights ** beta).astype(jnp.float32)
    else:
        cw_beta = jnp.ones((c,), jnp.float32)

    m_cut = (n // INTERVAL) * INTERVAL   # collect_grad_optim drops remainder rows
    lab1d = label.astype(jnp.int32)
    w1d = weight.astype(jnp.float32)

    if use_pallas:
        # ---- class-dim padding to a lane multiple (1204 -> 1280 at real C) ----
        c_pad = ((c + LANE - 1) // LANE) * LANE
        pc = c_pad - c
        # ---- row tiling / per-TensorCore split (1 on v5e/v6e, 2 on v7x) ----
        splits = _num_core_splits()
        if n < splits * 128:
            splits = 1
        tm = _pick_tm(n, c_pad, splits, cls_score.dtype.itemsize)
        chunk = splits * tm
        n_pad = ((n + chunk - 1) // chunk) * chunk
        tiles_per_core = n_pad // chunk
        pr = n_pad - n

        cls_pad = cls_score           # native dtype (f32 or bf16), no wrapper upcast
        if pc or pr:
            # padded columns get -1e9 logits -> exact zeros in the softmax
            cls_pad = jnp.pad(cls_pad, ((0, pr), (0, pc)), constant_values=-1e9)
        lab_pad = jnp.pad(lab1d, (0, pr)).reshape(n_pad, 1)
        w_pad = jnp.pad(w1d, (0, pr)).reshape(n_pad, 1)   # zero weight kills pad rows
        cwb_pad = jnp.pad(cw_beta, (0, pc)).reshape(1, c_pad)

        loss_raw, tmpw_raw, pos_sum, corr_sum = _run_pallas(
            cls_pad, lab_pad, w_pad, cwb_pad,
            m_cut=m_cut, tm=tm, splits=splits, tiles_per_core=tiles_per_core)
        loss_raw = loss_raw[:n]
        tmpw_raw = tmpw_raw[:n]
        pos_sum = pos_sum[:c]
        corr_sum = corr_sum[:c, :c]
    else:
        loss_raw, tmpw_raw, pos_sum, corr_sum = _ref_blocks(
            cls_score.astype(jnp.float32), lab1d, w1d, cw_beta, m_cut=m_cut)

    # ---- finish get_weight + weight_reduce_loss (reduction='mean') ----
    if iter_ >= 0:
        weights_mean = (EMA_FACTOR * state["weights_mean"]
                        + (1.0 - EMA_FACTOR) * jnp.mean(tmpw_raw))
        tmp_weight = tmpw_raw / weights_mean
    else:
        tmp_weight = jnp.ones((n,), jnp.float32)
    tmp_weight = tmp_weight * w1d
    loss = jnp.mean(loss_raw * tmp_weight)
    loss_out = LOSS_WEIGHT * loss

    # ---- finish collect_grad_optim ----
    if iter_ >= 0:
        pos_grad = pos_sum / n
        corr = corr_sum / n
        idx = jnp.arange(c)
        corr = corr.at[idx, idx].set(-pos_grad)
        corr_grad = corr * 100.0 * loss_weight
        # TODO(synk): dist.all_reduce(corr_grad) is an identity on a single device.
        if iter_ < WARM_UP_ITER:
            accu = (state["corr_grad_accu"] * iter_ + corr_grad) / (iter_ + 1)
            cw_out = class_weights
        else:
            accu = (EMA_FACTOR * state["corr_grad_accu"]
                    + (1.0 - EMA_FACTOR) * corr_grad)
            cw_out = jax.nn.softmax(state["classes_logits"]) * c
        tcw = ((cw_out[:, None] * accu).sum(axis=0)
               / (-accu[idx, idx] + 1e-6) + cw_out)
        if iter_ > WARM_UP_ITER:
            tcw = tcw.at[-1].set(c - tcw[:-1].sum())
            tcw = jnp.clip(tcw, LOWER_BOUND, UPPER_BOUND)
            tcw = tcw.at[-1].set(jnp.clip(tcw[-1], LOWER_BOUND, 1.0))
            tcw = jnp.log(tcw)
            loss_grad = jnp.mean((tcw - state["classes_logits"]) ** 2)
        else:
            loss_grad = 0.0 * loss
    else:
        cw_out = class_weights
        loss_grad = 0.0 * loss

    return loss_out, loss_grad, cw_out


if __name__ == "__main__":
    key = jax.random.PRNGKey(0)
    k1, k2, k3 = jax.random.split(key, 3)
    n, c = 128, NUM_CLASSES + 1
    cls_score = jax.random.normal(k1, (n, c), jnp.float32) * 2.0
    label = jax.random.randint(k2, (n,), 0, c, dtype=jnp.int32)
    weight = jax.random.uniform(k3, (n,), jnp.float32, minval=0.5, maxval=1.5)

    # deterministic "module state" exactly as in __init__
    state = dict(
        class_weights=jnp.ones((c,), jnp.float32),
        corr_grad_accu=jnp.zeros((c, c), jnp.float32),
        classes_logits=jnp.zeros((c,), jnp.float32),   # nn.Parameter(zeros)
        weights_mean=jnp.ones((), jnp.float32),
    )

    it = 9001  # past warm_up_iter -> exercises the full loss_grad path
    loss, loss_grad, cw = gbr_forward(cls_score, label, weight, state, iter_=it)
    jax.block_until_ready((loss, loss_grad, cw))

    # pure-JAX f32/HIGHEST reference (module-faithful) through the same wrapper
    loss_r, loss_grad_r, cw_r = gbr_forward(cls_score, label, weight, state,
                                            iter_=it, use_pallas=False)
    np.testing.assert_allclose(np.asarray(loss), np.asarray(loss_r),
                               rtol=1e-3, atol=1e-5)
    # loss_grad drifts slightly vs the f32/HIGHEST reference because the (C,C)
    # correlated-gradient matmul deliberately uses bf16 operands (f32 accumulate).
    np.testing.assert_allclose(np.asarray(loss_grad), np.asarray(loss_grad_r),
                               rtol=5e-2, atol=1e-3)
    np.testing.assert_allclose(np.asarray(cw), np.asarray(cw_r),
                               rtol=1e-6, atol=1e-6)

    # native-bf16 logit streaming path (no wrapper-side f32 copy of the logits)
    loss_b, loss_grad_b, _ = gbr_forward(cls_score.astype(jnp.bfloat16), label,
                                         weight, state, iter_=it)
    jax.block_until_ready((loss_b, loss_grad_b))
    np.testing.assert_allclose(np.asarray(loss_b), np.asarray(loss),
                               rtol=5e-2, atol=1e-3)

    print("KERNEL_OK")
</pallas_src>

<mosaic_0001>
module attributes {stable_mosaic.version = 11 : i64} {
  func.func @_gbr_kernel(%arg0: i32, %arg1: i32, %arg2: memref<128x128xf32, #tpu.memory_space<vmem>>, %arg3: memref<128x1xi32, #tpu.memory_space<vmem>>, %arg4: memref<128x1xf32, #tpu.memory_space<vmem>>, %arg5: memref<1x128xf32, #tpu.memory_space<vmem>>, %arg6: memref<128x2xf32, #tpu.memory_space<vmem>>, %arg7: memref<1x1x128xf32, #tpu.memory_space<vmem>>, %arg8: memref<1x128x128xf32, #tpu.memory_space<vmem>>) attributes {dimension_semantics = [#tpu.dimension_semantics<parallel>, #tpu.dimension_semantics<arbitrary>], iteration_bounds = array<i64: 1, 1>, scalar_prefetch = 0 : i64, scratch_operands = 0 : i64, tpu.core_type = #tpu.core_type<tc>, window_params = [{transform_indices = @transform_0, window_bounds = array<i64: 128, 128>}, {transform_indices = @transform_1, window_bounds = array<i64: 128, 1>}, {transform_indices = @transform_2, window_bounds = array<i64: 128, 1>}, {pipeline_mode = #tpu.pipeline_mode<synchronous>, transform_indices = @transform_3, window_bounds = array<i64: 1, 128>}, {transform_indices = @transform_4, window_bounds = array<i64: 128, 2>}, {transform_indices = @transform_5, window_bounds = array<i64: 1, 1, 128>}, {transform_indices = @transform_6, window_bounds = array<i64: 1, 128, 128>}]} {
    %c0 = arith.constant 0 : index
    %c0_0 = arith.constant 0 : index
    %0 = vector.load %arg2[%c0, %c0_0] : memref<128x128xf32, #tpu.memory_space<vmem>>, vector<128x128xf32>
    %c0_1 = arith.constant 0 : index
    %c0_2 = arith.constant 0 : index
    %1 = vector.load %arg3[%c0_1, %c0_2] : memref<128x1xi32, #tpu.memory_space<vmem>>, vector<128x1xi32>
    %c0_3 = arith.constant 0 : index
    %c0_4 = arith.constant 0 : index
    %2 = vector.load %arg4[%c0_3, %c0_4] : memref<128x1xf32, #tpu.memory_space<vmem>>, vector<128x1xf32>
    %c0_5 = arith.constant 0 : index
    %c0_6 = arith.constant 0 : index
    %3 = vector.load %arg5[%c0_5, %c0_6] : memref<1x128xf32, #tpu.memory_space<vmem>>, vector<1x128xf32>
    %4 = tpu.iota {dimensions = array<i32: 1>} : vector<128x128xi32>
    %5 = vector.broadcast %1 : vector<128x1xi32> to vector<128x128xi32>
    %6 = arith.cmpi eq, %4, %5 : vector<128x128xi32>
    %cst = arith.constant dense<0xFF800000> : vector<128xf32>
    %7 = vector.multi_reduction <maximumf>, %0, %cst [1] : vector<128x128xf32> to vector<128xf32>
    %8 = vector.shape_cast %7 : vector<128xf32> to vector<128x1xf32>
    %9 = vector.broadcast %8 : vector<128x1xf32> to vector<128x128xf32>
    %10 = arith.subf %0, %9 : vector<128x128xf32>
    %11 = math.exp %10 : vector<128x128xf32>
    %cst_7 = arith.constant dense<0.000000e+00> : vector<128xf32>
    %12 = vector.multi_reduction <add>, %11, %cst_7 [1] : vector<128x128xf32> to vector<128xf32>
    %13 = vector.shape_cast %12 : vector<128xf32> to vector<128x1xf32>
    %14 = math.log %13 : vector<128x1xf32>
    %15 = arith.addf %14, %8 : vector<128x1xf32>
    %16 = tpu.reciprocal %13 {approx = true} : vector<128x1xf32> -> vector<128x1xf32>
    %17 = vector.broadcast %16 : vector<128x1xf32> to vector<128x128xf32>
    %18 = arith.mulf %11, %17 : vector<128x128xf32>
    %cst_8 = arith.constant 9.99999974E-6 : f32
    %19 = vector.broadcast %cst_8 : f32 to vector<128x128xf32>
    %20 = arith.addf %18, %19 : vector<128x128xf32>
    %cst_9 = arith.constant 0.000000e+00 : f32
    %21 = vector.broadcast %cst_9 : f32 to vector<128x128xf32>
    %22 = arith.select %6, %0, %21 : vector<128x128xi1>, vector<128x128xf32>
    %cst_10 = arith.constant dense<0.000000e+00> : vector<128xf32>
    %23 = vector.multi_reduction <add>, %22, %cst_10 [1] : vector<128x128xf32> to vector<128xf32>
    %24 = vector.shape_cast %23 : vector<128xf32> to vector<128x1xf32>
    %25 = arith.subf %15, %24 : vector<128x1xf32>
    %cst_11 = arith.constant 0.000000e+00 : f32
    %26 = vector.broadcast %cst_11 : f32 to vector<128x1xf32>
    %27 = arith.subf %26, %25 : vector<128x1xf32>
    %28 = math.exp %27 : vector<128x1xf32>
    %cst_12 = arith.constant 1.000000e+00 : f32
    %29 = vector.broadcast %cst_12 : f32 to vector<128x1xf32>
    %30 = arith.subf %29, %28 : vector<128x1xf32>
    %31 = arith.mulf %30, %25 : vector<128x1xf32>
    %cst_13 = arith.constant 0.000000e+00 : f32
    %32 = vector.shape_cast %3 : vector<1x128xf32> to vector<1x128xf32>
    %33 = vector.broadcast %32 : vector<1x128xf32> to vector<128x128xf32>
    %34 = vector.broadcast %cst_13 : f32 to vector<128x128xf32>
    %35 = arith.select %6, %33, %34 : vector<128x128xi1>, vector<128x128xf32>
    %cst_14 = arith.constant dense<0.000000e+00> : vector<128xf32>
    %36 = vector.multi_reduction <add>, %35, %cst_14 [1] : vector<128x128xf32> to vector<128xf32>
    %37 = vector.shape_cast %36 : vector<128xf32> to vector<128x1xf32>
    %38 = tpu.iota {dimensions = array<i32: 1>} : vector<128x2xi32>
    %c0_i32 = arith.constant 0 : i32
    %39 = vector.broadcast %c0_i32 : i32 to vector<128x2xi32>
    %40 = arith.cmpi eq, %38, %39 : vector<128x2xi32>
    %41 = vector.shape_cast %31 : vector<128x1xf32> to vector<128x1xf32>
    %42 = vector.broadcast %41 : vector<128x1xf32> to vector<128x2xf32>
    %43 = vector.shape_cast %37 : vector<128x1xf32> to vector<128x1xf32>
    %44 = vector.broadcast %43 : vector<128x1xf32> to vector<128x2xf32>
    %45 = arith.select %40, %42, %44 : vector<128x2xi1>, vector<128x2xf32>
    %c0_15 = arith.constant 0 : index
    %c0_16 = arith.constant 0 : index
    %46 = vector.load %arg6[%c0_15, %c0_16] : memref<128x2xf32, #tpu.memory_space<vmem>>, vector<128x2xf32>
    tpu.vector_store %arg6[%c0_15, %c0_16], %45 {strides = array<i32>} : memref<128x2xf32, #tpu.memory_space<vmem>>, vector<128x2xf32>,
    %cst_17 = arith.constant 9.99999974E-6 : f32
    %47 = vector.broadcast %cst_17 : f32 to vector<128x1xf32>
    %48 = arith.addf %28, %47 : vector<128x1xf32>
    %cst_18 = arith.constant 1.000000e+00 : f32
    %49 = vector.broadcast %cst_18 : f32 to vector<128x1xf32>
    %50 = arith.subf %49, %48 : vector<128x1xf32>
    %51 = arith.divf %50, %48 : vector<128x1xf32>
    %52 = math.log %48 : vector<128x1xf32>
    %53 = arith.subf %51, %52 : vector<128x1xf32>
    %54 = arith.mulf %2, %53 : vector<128x1xf32>
    %cst_19 = arith.constant 1.000000e+00 : f32
    %55 = vector.broadcast %cst_19 : f32 to vector<128x1xf32>
    %56 = arith.subf %55, %48 : vector<128x1xf32>
    %57 = arith.mulf %56, %48 : vector<128x1xf32>
    %58 = arith.mulf %57, %54 : vector<128x1xf32>
    %cst_20 = arith.constant 0.000000e+00 : f32
    %59 = vector.shape_cast %58 : vector<128x1xf32> to vector<128x1xf32>
    %60 = vector.broadcast %59 : vector<128x1xf32> to vector<128x128xf32>
    %61 = vector.broadcast %cst_20 : f32 to vector<128x128xf32>
    %62 = arith.select %6, %60, %61 : vector<128x128xi1>, vector<128x128xf32>
    %cst_21 = arith.constant dense<0.000000e+00> : vector<128xf32>
    %63 = vector.multi_reduction <add>, %62, %cst_21 [0] : vector<128x128xf32> to vector<128xf32>
    %64 = vector.shape_cast %63 : vector<128xf32> to vector<1x128xf32>
    %c1_i32 = arith.constant 1 : i32
    %65 = arith.muli %arg0, %c1_i32 : i32
    %66 = arith.addi %65, %arg1 : i32
    %c128_i32 = arith.constant 128 : i32
    %67 = arith.muli %66, %c128_i32 : i32
    %68 = tpu.iota {dimensions = array<i32: 0>} : vector<128x1xi32>
    %69 = vector.broadcast %67 : i32 to vector<128x1xi32>
    %70 = arith.addi %69, %68 : vector<128x1xi32>
    %c128_i32_22 = arith.constant 128 : i32
    %71 = vector.broadcast %c128_i32_22 : i32 to vector<128x1xi32>
    %72 = arith.cmpi slt, %70, %71 : vector<128x1xi32>
    %73 = arith.extui %72 : vector<128x1xi1> to vector<128x1xi32>
    %74 = arith.sitofp %73 : vector<128x1xi32> to vector<128x1xf32>
    %75 = arith.mulf %48, %54 : vector<128x1xf32>
    %76 = arith.mulf %75, %74 : vector<128x1xf32>
    %cst_23 = arith.constant 0.000000e+00 : f32
    %77 = vector.shape_cast %76 : vector<128x1xf32> to vector<128x1xf32>
    %78 = vector.broadcast %77 : vector<128x1xf32> to vector<128x128xf32>
    %79 = vector.broadcast %cst_23 : f32 to vector<128x128xf32>
    %80 = arith.select %6, %78, %79 : vector<128x128xi1>, vector<128x128xf32>
    %81 = arith.truncf %80 : vector<128x128xf32> to vector<128x128xbf16>
    %82 = arith.truncf %20 : vector<128x128xf32> to vector<128x128xbf16>
    %cst_24 = arith.constant dense<0.000000e+00> : vector<128x128xf32>
    %83 = tpu.matmul %81, %82, %cst_24 {dimension_numbers = #tpu.dot_dimension_numbers<[0], [0], [1], [1], [0, 1, 1, 1], [], []>} : vector<128x128xbf16>, vector<128x128xbf16>, vector<128x128xf32> -> vector<128x128xf32>
    %c0_i32_25 = arith.constant 0 : i32
    %84 = arith.cmpi eq, %arg1, %c0_i32_25 : i32
    %85 = arith.extui %84 : i1 to i32
    %c0_i32_26 = arith.constant 0 : i32
    %86 = arith.cmpi ne, %85, %c0_i32_26 : i32
    scf.if %86 {
      %cst_39 = arith.constant 0.000000e+00 : f32
      %99 = vector.broadcast %cst_39 : f32 to vector<1x128xf32>
      %c0_40 = arith.constant 0 : index
      %c0_41 = arith.constant 0 : index
      %c0_42 = arith.constant 0 : index
      %100 = vector.load %arg7[%c0_40, %c0_41, %c0_42] : memref<1x1x128xf32, #tpu.memory_space<vmem>>, vector<1x1x128xf32>
      %101 = vector.shape_cast %100 : vector<1x1x128xf32> to vector<1x128xf32>
      %102 = vector.shape_cast %99 : vector<1x128xf32> to vector<1x1x128xf32>
      tpu.vector_store %arg7[%c0_40, %c0_41, %c0_42], %102 {strides = array<i32>} : memref<1x1x128xf32, #tpu.memory_space<vmem>>, vector<1x1x128xf32>,
      %cst_43 = arith.constant 0.000000e+00 : f32
      %103 = vector.broadcast %cst_43 : f32 to vector<128x128xf32>
      %c0_44 = arith.constant 0 : index
      %c0_45 = arith.constant 0 : index
      %c0_46 = arith.constant 0 : index
      %104 = vector.load %arg8[%c0_44, %c0_45, %c0_46] : memref<1x128x128xf32, #tpu.memory_space<vmem>>, vector<1x128x128xf32>
      %105 = vector.shape_cast %104 : vector<1x128x128xf32> to vector<128x128xf32>
      %106 = vector.shape_cast %103 : vector<128x128xf32> to vector<1x128x128xf32>
      tpu.vector_store %arg8[%c0_44, %c0_45, %c0_46], %106 {strides = array<i32>} : memref<1x128x128xf32, #tpu.memory_space<vmem>>, vector<1x128x128xf32>,
    } else {
    }
    %c0_27 = arith.constant 0 : index
    %c0_28 = arith.constant 0 : index
    %c0_29 = arith.constant 0 : index
    %87 = vector.load %arg7[%c0_27, %c0_28, %c0_29] : memref<1x1x128xf32, #tpu.memory_space<vmem>>, vector<1x1x128xf32>
    %88 = vector.shape_cast %87 : vector<1x1x128xf32> to vector<1x128xf32>
    %89 = arith.addf %88, %64 : vector<1x128xf32>
    %c0_30 = arith.constant 0 : index
    %c0_31 = arith.constant 0 : index
    %c0_32 = arith.constant 0 : index
    %90 = vector.load %arg7[%c0_30, %c0_31, %c0_32] : memref<1x1x128xf32, #tpu.memory_space<vmem>>, vector<1x1x128xf32>
    %91 = vector.shape_cast %90 : vector<1x1x128xf32> to vector<1x128xf32>
    %92 = vector.shape_cast %89 : vector<1x128xf32> to vector<1x1x128xf32>
    tpu.vector_store %arg7[%c0_30, %c0_31, %c0_32], %92 {strides = array<i32>} : memref<1x1x128xf32, #tpu.memory_space<vmem>>, vector<1x1x128xf32>,
    %c0_33 = arith.constant 0 : index
    %c0_34 = arith.constant 0 : index
    %c0_35 = arith.constant 0 : index
    %93 = vector.load %arg8[%c0_33, %c0_34, %c0_35] : memref<1x128x128xf32, #tpu.memory_space<vmem>>, vector<1x128x128xf32>
    %94 = vector.shape_cast %93 : vector<1x128x128xf32> to vector<128x128xf32>
    %95 = arith.addf %94, %83 : vector<128x128xf32>
    %c0_36 = arith.constant 0 : index
    %c0_37 = arith.constant 0 : index
    %c0_38 = arith.constant 0 : index
    %96 = vector.load %arg8[%c0_36, %c0_37, %c0_38] : memref<1x128x128xf32, #tpu.memory_space<vmem>>, vector<1x128x128xf32>
    %97 = vector.shape_cast %96 : vector<1x128x128xf32> to vector<128x128xf32>
    %98 = vector.shape_cast %95 : vector<128x128xf32> to vector<1x128x128xf32>
    tpu.vector_store %arg8[%c0_36, %c0_37, %c0_38], %98 {strides = array<i32>} : memref<1x128x128xf32, #tpu.memory_space<vmem>>, vector<1x128x128xf32>,
    return
  }
  func.func @transform_0(%arg0: i32, %arg1: i32) -> (i32, i32) {
    %c1_i32 = arith.constant 1 : i32
    %0 = arith.muli %arg0, %c1_i32 : i32
    %1 = arith.addi %0, %arg1 : i32
    %c0_i32 = arith.constant 0 : i32
    %c0_i32_0 = arith.constant 0 : i32
    return %1, %c0_i32 : i32, i32
  }
  func.func @transform_1(%arg0: i32, %arg1: i32) -> (i32, i32) {
    %c1_i32 = arith.constant 1 : i32
    %0 = arith.muli %arg0, %c1_i32 : i32
    %1 = arith.addi %0, %arg1 : i32
    %c0_i32 = arith.constant 0 : i32
    %c0_i32_0 = arith.constant 0 : i32
    return %1, %c0_i32 : i32, i32
  }
  func.func @transform_2(%arg0: i32, %arg1: i32) -> (i32, i32) {
    %c1_i32 = arith.constant 1 : i32
    %0 = arith.muli %arg0, %c1_i32 : i32
    %1 = arith.addi %0, %arg1 : i32
    %c0_i32 = arith.constant 0 : i32
    %c0_i32_0 = arith.constant 0 : i32
    return %1, %c0_i32 : i32, i32
  }
  func.func @transform_3(%arg0: i32, %arg1: i32) -> (i32, i32) {
    %c0_i32 = arith.constant 0 : i32
    %c0_i32_0 = arith.constant 0 : i32
    %c0_i32_1 = arith.constant 0 : i32
    return %c0_i32, %c0_i32_0 : i32, i32
  }
  func.func @transform_4(%arg0: i32, %arg1: i32) -> (i32, i32) {
    %c1_i32 = arith.constant 1 : i32
    %0 = arith.muli %arg0, %c1_i32 : i32
    %1 = arith.addi %0, %arg1 : i32
    %c0_i32 = arith.constant 0 : i32
    %c0_i32_0 = arith.constant 0 : i32
    return %1, %c0_i32 : i32, i32
  }
  func.func @transform_5(%arg0: i32, %arg1: i32) -> (i32, i32, i32) {
    %c0_i32 = arith.constant 0 : i32
    %c0_i32_0 = arith.constant 0 : i32
    %c0_i32_1 = arith.constant 0 : i32
    return %arg0, %c0_i32, %c0_i32_0 : i32, i32, i32
  }
  func.func @transform_6(%arg0: i32, %arg1: i32) -> (i32, i32, i32) {
    %c0_i32 = arith.constant 0 : i32
    %c0_i32_0 = arith.constant 0 : i32
    %c0_i32_1 = arith.constant 0 : i32
    return %arg0, %c0_i32, %c0_i32_0 : i32, i32, i32
  }
}

</mosaic_0001>

<llo_original>
// kernel: tpu_custom_call.1
$region0: #{tpu_custom_call.1}
  #allocation0 [shape = 'u32[]', space=smem, size = 0x4, offset = 0x4, fixed_abs, tag = 'smem constant byte address 0x4 - core index']
  #allocation1 [shape = 'u32[144,128]{1,0:T(1,128)}', space=vmem, size = 0x12000, scoped, tag = 'internal scratch']
  %s0 = inlined_call_operand.vmem [shape: f32[128,128], index: 0, kind: input, shape index: {}]
  %s1 = inlined_call_operand.vmem [shape: s32[128,1], index: 1, kind: input, shape index: {}]
  %s2 = inlined_call_operand.vmem [shape: f32[128,1], index: 2, kind: input, shape index: {}]
  %s3 = inlined_call_operand.vmem [shape: f32[1,128], index: 3, kind: input, shape index: {}]
  %s4 = inlined_call_operand.vmem [shape: f32[128,2], index: 4, kind: output, shape index: {0}]
  %s5 = inlined_call_operand.hbm [shape: f32[1,1,128], index: 5, kind: output, shape index: {1}]
  %s6 = inlined_call_operand.hbm [shape: f32[1,128,128], index: 6, kind: output, shape index: {2}]
  %7 = xla_tuple %s4, %s5, %s6
  %s8 = sld [smem:[#allocation0]]
  $region46: #{tpu_custom_call.1} parent=0
    _
  %s10 = ssub.s32 1, %s8
  %s11 = scalar_select 0, %s10, %s8
  $region1: #{tpu_custom_call.1} parent=0
    #allocation2 [shape = 'u8[512]{0}', space=vmem, size = 0x400, scoped, tag = 'output window, operand 1, single buffered']
    #allocation3 [shape = 's32[1]{0}', space=sflag, size = 0x4, scoped, tag = 'scoped memory for tpu_custom_call.1']
    #allocation4 [shape = 'u8[65536]{0}', space=vmem, size = 0x10000, scoped, tag = 'output window, operand 2, single buffered']
    #allocation5 [shape = 's32[1]{0}', space=sflag, size = 0x4, scoped, tag = 'scoped memory for tpu_custom_call.1']
    %12 = vsyncpa [#allocation3], 0
    %13 = vsyncpa [#allocation5], 0
    // Predicated region
    $region2: #{tpu_custom_call.1} parent=1 // pred_check
      _
    $region3: #{tpu_custom_call.1} parent=1 // pred_check_branch
      %15 = sbr.rel (0) target = $region5
    $region4: #{tpu_custom_call.1} parent=1 // pred_region
      %s16 = sadd.s32 0, 0
      %s17 = smul.u32 16, %s16
      %p18 = scmp.lt.s32.totalorder %s17, 15
      %s19 = scalar_select %p18, %s17, 15
      %s20 = smul.addr %s19, 8
      %s21 = scalar_lea.vmem %s0, %s20
      %s22 = sadd.s32 0, 0
      %s23 = smul.u32 16, %s22
    $region5: #{tpu_custom_call.1} parent=1 // pred_fallthru
      _
    // Predicated region
    $region6: #{tpu_custom_call.1} parent=1 // pred_check
      _
    $region7: #{tpu_custom_call.1} parent=1 // pred_check_branch
      %25 = sbr.rel (0) target = $region9
    $region8: #{tpu_custom_call.1} parent=1 // pred_region
      %s26 = sadd.s32 0, 0
      %s27 = smul.u32 16, %s26
      %p28 = scmp.lt.s32.totalorder %s27, 15
      %s29 = scalar_select %p28, %s27, 15
      %s30 = smul.addr %s29, 8
      %s31 = scalar_lea.vmem %s1, %s30
      %s32 = sadd.s32 0, 0
      %s33 = smul.u32 16, %s32
    $region9: #{tpu_custom_call.1} parent=1 // pred_fallthru
      _
    // Predicated region
    $region10: #{tpu_custom_call.1} parent=1 // pred_check
      _
    $region11: #{tpu_custom_call.1} parent=1 // pred_check_branch
      %35 = sbr.rel (0) target = $region13
    $region12: #{tpu_custom_call.1} parent=1 // pred_region
      %s36 = sadd.s32 0, 0
      %s37 = smul.u32 16, %s36
      %p38 = scmp.lt.s32.totalorder %s37, 15
      %s39 = scalar_select %p38, %s37, 15
      %s40 = smul.addr %s39, 8
      %s41 = scalar_lea.vmem %s2, %s40
      %s42 = sadd.s32 0, 0
      %s43 = smul.u32 16, %s42
    $region13: #{tpu_custom_call.1} parent=1 // pred_fallthru
      _
    // Predicated region
    $region14: #{tpu_custom_call.1} parent=1 // pred_check
      _
    $region15: #{tpu_custom_call.1} parent=1 // pred_check_branch
      %45 = sbr.rel (0) target = $region17
    $region16: #{tpu_custom_call.1} parent=1 // pred_region
      _
    $region17: #{tpu_custom_call.1} parent=1 // pred_fallthru
      _
    %s46 = sadd.s32 0, 0
    %s47 = smul.u32 16, %s46
    %p48 = scmp.lt.s32.totalorder %s47, 15
    %s49 = scalar_select %p48, %s47, 15
    %s50 = smul.addr %s49, 8
    %s51 = scalar_lea.vmem %s0, %s50
    %s52 = sadd.s32 0, 0
    %s53 = smul.u32 16, %s52
    %p54 = scmp.lt.s32.totalorder %s53, 15
    %s55 = scalar_select %p54, %s53, 15
    %s56 = smul.addr %s55, 8
    %s57 = scalar_lea.vmem %s1, %s56
    %s58 = sadd.s32 0, 0
    %s59 = smul.u32 16, %s58
    %p60 = scmp.lt.s32.totalorder %s59, 15
    %s61 = scalar_select %p60, %s59, 15
    %s62 = smul.addr %s61, 8
    %s63 = scalar_lea.vmem %s2, %s62
    %s64 = sadd.s32 0, 0
    %s65 = smul.u32 16, %s64
    %p66 = scmp.lt.s32.totalorder %s65, 15
    %s67 = scalar_select %p66, %s65, 15
    %s68 = smul.addr %s67, 8
    %s69 = scalar_lea.vmem %s4, %s68
    %s70 = sadd.s32 0, 0
    %s71 = smul.u32 16, %s70
    %p72 = scmp.lt.s32.totalorder %s71, 15
    %s73 = scalar_select %p72, %s71, 15
    %s74 = smul.addr %s73, 8
    %s75 = scalar_lea.vmem %s0, %s74
    %s76 = sadd.s32 0, 0
    %s77 = smul.u32 16, %s76
    %s78 = sadd.s32 0, 0
    %s79 = smul.u32 16, %s78
    %p80 = scmp.lt.s32.totalorder %s79, 15
    %s81 = scalar_select %p80, %s79, 15
    %s82 = smul.addr %s81, 8
    %s83 = scalar_lea.vmem %s1, %s82
    %s84 = sadd.s32 0, 0
    %s85 = smul.u32 16, %s84
    %s86 = sadd.s32 0, 0
    %s87 = smul.u32 16, %s86
    %p88 = scmp.lt.s32.totalorder %s87, 15
    %s89 = scalar_select %p88, %s87, 15
    %s90 = smul.addr %s89, 8
    %s91 = scalar_lea.vmem %s2, %s90
    %s92 = sadd.s32 0, 0
    %s93 = smul.u32 16, %s92
    %s94 = sadd.s32 0, 0
    %s95 = smul.u32 16, %s94
    %p96 = scmp.lt.s32.totalorder %s95, 15
    %s97 = scalar_select %p96, %s95, 15
    %s98 = smul.addr %s97, 8
    %s99 = scalar_lea.vmem %s4, %s98
    %s100 = sadd.s32 0, 0
    %s101 = smul.u32 16, %s100
    %v103 = vld [vmem:[%s75] sm:$0xff]
    %v104 = vld [vmem:[%s75 + $0x8] sm:$0xff]
    %v105 = vld [vmem:[%s75 + $0x10] sm:$0xff]
    %v106 = vld [vmem:[%s75 + $0x18] sm:$0xff]
    %v107 = vld [vmem:[%s75 + $0x20] sm:$0xff]
    %v108 = vld [vmem:[%s75 + $0x28] sm:$0xff]
    %v109 = vld [vmem:[%s75 + $0x30] sm:$0xff]
    %v110 = vld [vmem:[%s75 + $0x38] sm:$0xff]
    %v111 = vld [vmem:[%s75 + $0x40] sm:$0xff]
    %v112 = vld [vmem:[%s75 + $0x48] sm:$0xff]
    %v113 = vld [vmem:[%s75 + $0x50] sm:$0xff]
    %v114 = vld [vmem:[%s75 + $0x58] sm:$0xff]
    %v115 = vld [vmem:[%s75 + $0x60] sm:$0xff]
    %v116 = vld [vmem:[%s75 + $0x68] sm:$0xff]
    %v117 = vld [vmem:[%s75 + $0x70] sm:$0xff]
    %v118 = vld [vmem:[%s75 + $0x78] sm:$0xff]
    %v119 = vld [vmem:[%s83] sm:$0xff]
    %v120 = vld [vmem:[%s83 + $0x8] sm:$0xff]
    %v121 = vld [vmem:[%s83 + $0x10] sm:$0xff]
    %v122 = vld [vmem:[%s83 + $0x18] sm:$0xff]
    %v123 = vld [vmem:[%s83 + $0x20] sm:$0xff]
    %v124 = vld [vmem:[%s83 + $0x28] sm:$0xff]
    %v125 = vld [vmem:[%s83 + $0x30] sm:$0xff]
    %v126 = vld [vmem:[%s83 + $0x38] sm:$0xff]
    %v127 = vld [vmem:[%s83 + $0x40] sm:$0xff]
    %v128 = vld [vmem:[%s83 + $0x48] sm:$0xff]
    %v129 = vld [vmem:[%s83 + $0x50] sm:$0xff]
    %v130 = vld [vmem:[%s83 + $0x58] sm:$0xff]
    %v131 = vld [vmem:[%s83 + $0x60] sm:$0xff]
    %v132 = vld [vmem:[%s83 + $0x68] sm:$0xff]
    %v133 = vld [vmem:[%s83 + $0x70] sm:$0xff]
    %v134 = vld [vmem:[%s83 + $0x78] sm:$0xff]
    %v135 = vld [vmem:[%s91] sm:$0xff]
    %v136 = vld [vmem:[%s91 + $0x8] sm:$0xff]
    %v137 = vld [vmem:[%s91 + $0x10] sm:$0xff]
    %v138 = vld [vmem:[%s91 + $0x18] sm:$0xff]
    %v139 = vld [vmem:[%s91 + $0x20] sm:$0xff]
    %v140 = vld [vmem:[%s91 + $0x28] sm:$0xff]
    %v141 = vld [vmem:[%s91 + $0x30] sm:$0xff]
    %v142 = vld [vmem:[%s91 + $0x38] sm:$0xff]
    %v143 = vld [vmem:[%s91 + $0x40] sm:$0xff]
    %v144 = vld [vmem:[%s91 + $0x48] sm:$0xff]
    %v145 = vld [vmem:[%s91 + $0x50] sm:$0xff]
    %v146 = vld [vmem:[%s91 + $0x58] sm:$0xff]
    %v147 = vld [vmem:[%s91 + $0x60] sm:$0xff]
    %v148 = vld [vmem:[%s91 + $0x68] sm:$0xff]
    %v149 = vld [vmem:[%s91 + $0x70] sm:$0xff]
    %v150 = vld [vmem:[%s91 + $0x78] sm:$0xff]
    %v151 = vld [vmem:[%s3] sm:$0x1]
    %v152 = vlaneseq
    %v153 = vand.u32 %v152, 127
    %154 = vset.pattern.permute.xlu0 0
    %155 = vperm.xlu0 %154, %v119
    %v156 = vpop.permute.xlu0 %155
    %157 = vset.pattern.permute.xlu0 0
    %158 = vperm.xlu0 %157, %v120
    %v159 = vpop.permute.xlu0 %158
    %160 = vset.pattern.permute.xlu0 0
    %161 = vperm.xlu0 %160, %v121
    %v162 = vpop.permute.xlu0 %161
    %163 = vset.pattern.permute.xlu0 0
    %164 = vperm.xlu0 %163, %v122
    %v165 = vpop.permute.xlu0 %164
    %166 = vset.pattern.permute.xlu0 0
    %167 = vperm.xlu0 %166, %v123
    %v168 = vpop.permute.xlu0 %167
    %169 = vset.pattern.permute.xlu0 0
    %170 = vperm.xlu0 %169, %v124
    %v171 = vpop.permute.xlu0 %170
    %172 = vset.pattern.permute.xlu0 0
    %173 = vperm.xlu0 %172, %v125
    %v174 = vpop.permute.xlu0 %173
    %175 = vset.pattern.permute.xlu0 0
    %176 = vperm.xlu0 %175, %v126
    %v177 = vpop.permute.xlu0 %176
    %178 = vset.pattern.permute.xlu0 0
    %179 = vperm.xlu0 %178, %v127
    %v180 = vpop.permute.xlu0 %179
    %181 = vset.pattern.permute.xlu0 0
    %182 = vperm.xlu0 %181, %v128
    %v183 = vpop.permute.xlu0 %182
    %184 = vset.pattern.permute.xlu0 0
    %185 = vperm.xlu0 %184, %v129
    %v186 = vpop.permute.xlu0 %185
    %187 = vset.pattern.permute.xlu0 0
    %188 = vperm.xlu0 %187, %v130
    %v189 = vpop.permute.xlu0 %188
    %190 = vset.pattern.permute.xlu0 0
    %191 = vperm.xlu0 %190, %v131
    %v192 = vpop.permute.xlu0 %191
    %193 = vset.pattern.permute.xlu0 0
    %194 = vperm.xlu0 %193, %v132
    %v195 = vpop.permute.xlu0 %194
    %196 = vset.pattern.permute.xlu0 0
    %197 = vperm.xlu0 %196, %v133
    %v198 = vpop.permute.xlu0 %197
    %199 = vset.pattern.permute.xlu0 0
    %200 = vperm.xlu0 %199, %v134
    %v201 = vpop.permute.xlu0 %200
    %vm202 = vcmp.eq.s32.totalorder %v153, %v156
    %vm203 = vcmp.eq.s32.totalorder %v153, %v159
    %vm204 = vcmp.eq.s32.totalorder %v153, %v162
    %vm205 = vcmp.eq.s32.totalorder %v153, %v165
    %vm206 = vcmp.eq.s32.totalorder %v153, %v168
    %vm207 = vcmp.eq.s32.totalorder %v153, %v171
    %vm208 = vcmp.eq.s32.totalorder %v153, %v174
    %vm209 = vcmp.eq.s32.totalorder %v153, %v177
    %vm210 = vcmp.eq.s32.totalorder %v153, %v180
    %vm211 = vcmp.eq.s32.totalorder %v153, %v183
    %vm212 = vcmp.eq.s32.totalorder %v153, %v186
    %vm213 = vcmp.eq.s32.totalorder %v153, %v189
    %vm214 = vcmp.eq.s32.totalorder %v153, %v192
    %vm215 = vcmp.eq.s32.totalorder %v153, %v195
    %vm216 = vcmp.eq.s32.totalorder %v153, %v198
    %vm217 = vcmp.eq.s32.totalorder %v153, %v201
    %218 = vmax.xlane.f32.xlu0 %v103
    %v219 = vpop.xlane.xlu0 %218
    %220 = vmax.xlane.f32.xlu0 %v104
    %v221 = vpop.xlane.xlu0 %220
    %222 = vmax.xlane.f32.xlu0 %v105
    %v223 = vpop.xlane.xlu0 %222
    %224 = vmax.xlane.f32.xlu0 %v106
    %v225 = vpop.xlane.xlu0 %224
    %226 = vmax.xlane.f32.xlu0 %v107
    %v227 = vpop.xlane.xlu0 %226
    %228 = vmax.xlane.f32.xlu0 %v108
    %v229 = vpop.xlane.xlu0 %228
    %230 = vmax.xlane.f32.xlu0 %v109
    %v231 = vpop.xlane.xlu0 %230
    %232 = vmax.xlane.f32.xlu0 %v110
    %v233 = vpop.xlane.xlu0 %232
    %234 = vmax.xlane.f32.xlu0 %v111
    %v235 = vpop.xlane.xlu0 %234
    %236 = vmax.xlane.f32.xlu0 %v112
    %v237 = vpop.xlane.xlu0 %236
    %238 = vmax.xlane.f32.xlu0 %v113
    %v239 = vpop.xlane.xlu0 %238
    %240 = vmax.xlane.f32.xlu0 %v114
    %v241 = vpop.xlane.xlu0 %240
    %242 = vmax.xlane.f32.xlu0 %v115
    %v243 = vpop.xlane.xlu0 %242
    %244 = vmax.xlane.f32.xlu0 %v116
    %v245 = vpop.xlane.xlu0 %244
    %246 = vmax.xlane.f32.xlu0 %v117
    %v247 = vpop.xlane.xlu0 %246
    %248 = vmax.xlane.f32.xlu0 %v118
    %v249 = vpop.xlane.xlu0 %248
    %v250 = vsub.f32 %v103, %v219
    %v251 = vsub.f32 %v104, %v221
    %v252 = vsub.f32 %v105, %v223
    %v253 = vsub.f32 %v106, %v225
    %v254 = vsub.f32 %v107, %v227
    %v255 = vsub.f32 %v108, %v229
    %v256 = vsub.f32 %v109, %v231
    %v257 = vsub.f32 %v110, %v233
    %v258 = vsub.f32 %v111, %v235
    %v259 = vsub.f32 %v112, %v237
    %v260 = vsub.f32 %v113, %v239
    %v261 = vsub.f32 %v114, %v241
    %v262 = vsub.f32 %v115, %v243
    %v263 = vsub.f32 %v116, %v245
    %v264 = vsub.f32 %v117, %v247
    %v265 = vsub.f32 %v118, %v249
    %v266 = vmul.f32 %v250, 1.442695
    %v267 = vpow.pop %v266
    %v268 = vmul.f32 %v251, 1.442695
    %v269 = vpow.pop %v268
    %v270 = vmul.f32 %v252, 1.442695
    %v271 = vpow.pop %v270
    %v272 = vmul.f32 %v253, 1.442695
    %v273 = vpow.pop %v272
    %v274 = vmul.f32 %v254, 1.442695
    %v275 = vpow.pop %v274
    %v276 = vmul.f32 %v255, 1.442695
    %v277 = vpow.pop %v276
    %v278 = vmul.f32 %v256, 1.442695
    %v279 = vpow.pop %v278
    %v280 = vmul.f32 %v257, 1.442695
    %v281 = vpow.pop %v280
    %v282 = vmul.f32 %v258, 1.442695
    %v283 = vpow.pop %v282
    %v284 = vmul.f32 %v259, 1.442695
    %v285 = vpow.pop %v284
    %v286 = vmul.f32 %v260, 1.442695
    %v287 = vpow.pop %v286
    %v288 = vmul.f32 %v261, 1.442695
    %v289 = vpow.pop %v288
    %v290 = vmul.f32 %v262, 1.442695
    %v291 = vpow.pop %v290
    %v292 = vmul.f32 %v263, 1.442695
    %v293 = vpow.pop %v292
    %v294 = vmul.f32 %v264, 1.442695
    %v295 = vpow.pop %v294
    %v296 = vmul.f32 %v265, 1.442695
    %v297 = vpow.pop %v296
    %298 = vadd.xlane.f32.xlu0 %v267
    %v299 = vpop.xlane.xlu0 %298
    %300 = vadd.xlane.f32.xlu0 %v269
    %v301 = vpop.xlane.xlu0 %300
    %302 = vadd.xlane.f32.xlu0 %v271
    %v303 = vpop.xlane.xlu0 %302
    %304 = vadd.xlane.f32.xlu0 %v273
    %v305 = vpop.xlane.xlu0 %304
    %306 = vadd.xlane.f32.xlu0 %v275
    %v307 = vpop.xlane.xlu0 %306
    %308 = vadd.xlane.f32.xlu0 %v277
    %v309 = vpop.xlane.xlu0 %308
    %310 = vadd.xlane.f32.xlu0 %v279
    %v311 = vpop.xlane.xlu0 %310
    %312 = vadd.xlane.f32.xlu0 %v281
    %v313 = vpop.xlane.xlu0 %312
    %314 = vadd.xlane.f32.xlu0 %v283
    %v315 = vpop.xlane.xlu0 %314
    %316 = vadd.xlane.f32.xlu0 %v285
    %v317 = vpop.xlane.xlu0 %316
    %318 = vadd.xlane.f32.xlu0 %v287
    %v319 = vpop.xlane.xlu0 %318
    %320 = vadd.xlane.f32.xlu0 %v289
    %v321 = vpop.xlane.xlu0 %320
    %322 = vadd.xlane.f32.xlu0 %v291
    %v323 = vpop.xlane.xlu0 %322
    %324 = vadd.xlane.f32.xlu0 %v293
    %v325 = vpop.xlane.xlu0 %324
    %326 = vadd.xlane.f32.xlu0 %v295
    %v327 = vpop.xlane.xlu0 %326
    %328 = vadd.xlane.f32.xlu0 %v297
    %v329 = vpop.xlane.xlu0 %328
    %v330 = vlog2.pop %v299
    %v331 = vmul.f32 %v330, 0.6931472
    %v332 = vlog2.pop %v301
    %v333 = vmul.f32 %v332, 0.6931472
    %v334 = vlog2.pop %v303
    %v335 = vmul.f32 %v334, 0.6931472
    %v336 = vlog2.pop %v305
    %v337 = vmul.f32 %v336, 0.6931472
    %v338 = vlog2.pop %v307
    %v339 = vmul.f32 %v338, 0.6931472
    %v340 = vlog2.pop %v309
    %v341 = vmul.f32 %v340, 0.6931472
    %v342 = vlog2.pop %v311
    %v343 = vmul.f32 %v342, 0.6931472
    %v344 = vlog2.pop %v313
    %v345 = vmul.f32 %v344, 0.6931472
    %v346 = vlog2.pop %v315
    %v347 = vmul.f32 %v346, 0.6931472
    %v348 = vlog2.pop %v317
    %v349 = vmul.f32 %v348, 0.6931472
    %v350 = vlog2.pop %v319
    %v351 = vmul.f32 %v350, 0.6931472
    %v352 = vlog2.pop %v321
    %v353 = vmul.f32 %v352, 0.6931472
    %v354 = vlog2.pop %v323
    %v355 = vmul.f32 %v354, 0.6931472
    %v356 = vlog2.pop %v325
    %v357 = vmul.f32 %v356, 0.6931472
    %v358 = vlog2.pop %v327
    %v359 = vmul.f32 %v358, 0.6931472
    %v360 = vlog2.pop %v329
    %v361 = vmul.f32 %v360, 0.6931472
    %v362 = vadd.f32 %v331, %v219
    %v363 = vadd.f32 %v333, %v221
    %v364 = vadd.f32 %v335, %v223
    %v365 = vadd.f32 %v337, %v225
    %v366 = vadd.f32 %v339, %v227
    %v367 = vadd.f32 %v341, %v229
    %v368 = vadd.f32 %v343, %v231
    %v369 = vadd.f32 %v345, %v233
    %v370 = vadd.f32 %v347, %v235
    %v371 = vadd.f32 %v349, %v237
    %v372 = vadd.f32 %v351, %v239
    %v373 = vadd.f32 %v353, %v241
    %v374 = vadd.f32 %v355, %v243
    %v375 = vadd.f32 %v357, %v245
    %v376 = vadd.f32 %v359, %v247
    %v377 = vadd.f32 %v361, %v249
    %v378 = vrcp.pop %v299
    %v379 = vrcp.pop %v301
    %v380 = vrcp.pop %v303
    %v381 = vrcp.pop %v305
    %v382 = vrcp.pop %v307
    %v383 = vrcp.pop %v309
    %v384 = vrcp.pop %v311
    %v385 = vrcp.pop %v313
    %v386 = vrcp.pop %v315
    %v387 = vrcp.pop %v317
    %v388 = vrcp.pop %v319
    %v389 = vrcp.pop %v321
    %v390 = vrcp.pop %v323
    %v391 = vrcp.pop %v325
    %v392 = vrcp.pop %v327
    %v393 = vrcp.pop %v329
    %v394 = vmul.f32 %v267, %v378
    %v395 = vmul.f32 %v269, %v379
    %v396 = vmul.f32 %v271, %v380
    %v397 = vmul.f32 %v273, %v381
    %v398 = vmul.f32 %v275, %v382
    %v399 = vmul.f32 %v277, %v383
    %v400 = vmul.f32 %v279, %v384
    %v401 = vmul.f32 %v281, %v385
    %v402 = vmul.f32 %v283, %v386
    %v403 = vmul.f32 %v285, %v387
    %v404 = vmul.f32 %v287, %v388
    %v405 = vmul.f32 %v289, %v389
    %v406 = vmul.f32 %v291, %v390
    %v407 = vmul.f32 %v293, %v391
    %v408 = vmul.f32 %v295, %v392
    %v409 = vmul.f32 %v297, %v393
    %v410 = vadd.f32 %v394, 1e-05
    %v411 = vadd.f32 %v395, 1e-05
    %v412 = vadd.f32 %v396, 1e-05
    %v413 = vadd.f32 %v397, 1e-05
    %v414 = vadd.f32 %v398, 1e-05
    %v415 = vadd.f32 %v399, 1e-05
    %v416 = vadd.f32 %v400, 1e-05
    %v417 = vadd.f32 %v401, 1e-05
    %v418 = vadd.f32 %v402, 1e-05
    %v419 = vadd.f32 %v403, 1e-05
    %v420 = vadd.f32 %v404, 1e-05
    %v421 = vadd.f32 %v405, 1e-05
    %v422 = vadd.f32 %v406, 1e-05
    %v423 = vadd.f32 %v407, 1e-05
    %v424 = vadd.f32 %v408, 1e-05
    %v425 = vadd.f32 %v409, 1e-05
    %v426 = vsel %vm202, %v103, 0.0
    %v427 = vsel %vm203, %v104, 0.0
    %v428 = vsel %vm204, %v105, 0.0
    %v429 = vsel %vm205, %v106, 0.0
    %v430 = vsel %vm206, %v107, 0.0
    %v431 = vsel %vm207, %v108, 0.0
    %v432 = vsel %vm208, %v109, 0.0
    %v433 = vsel %vm209, %v110, 0.0
    %v434 = vsel %vm210, %v111, 0.0
    %v435 = vsel %vm211, %v112, 0.0
    %v436 = vsel %vm212, %v113, 0.0
    %v437 = vsel %vm213, %v114, 0.0
    %v438 = vsel %vm214, %v115, 0.0
    %v439 = vsel %vm215, %v116, 0.0
    %v440 = vsel %vm216, %v117, 0.0
    %v441 = vsel %vm217, %v118, 0.0
    %442 = vadd.xlane.f32.xlu0 %v426
    %v443 = vpop.xlane.xlu0 %442
    %444 = vadd.xlane.f32.xlu0 %v427
    %v445 = vpop.xlane.xlu0 %444
    %446 = vadd.xlane.f32.xlu0 %v428
    %v447 = vpop.xlane.xlu0 %446
    %448 = vadd.xlane.f32.xlu0 %v429
    %v449 = vpop.xlane.xlu0 %448
    %450 = vadd.xlane.f32.xlu0 %v430
    %v451 = vpop.xlane.xlu0 %450
    %452 = vadd.xlane.f32.xlu0 %v431
    %v453 = vpop.xlane.xlu0 %452
    %454 = vadd.xlane.f32.xlu0 %v432
    %v455 = vpop.xlane.xlu0 %454
    %456 = vadd.xlane.f32.xlu0 %v433
    %v457 = vpop.xlane.xlu0 %456
    %458 = vadd.xlane.f32.xlu0 %v434
    %v459 = vpop.xlane.xlu0 %458
    %460 = vadd.xlane.f32.xlu0 %v435
    %v461 = vpop.xlane.xlu0 %460
    %462 = vadd.xlane.f32.xlu0 %v436
    %v463 = vpop.xlane.xlu0 %462
    %464 = vadd.xlane.f32.xlu0 %v437
    %v465 = vpop.xlane.xlu0 %464
    %466 = vadd.xlane.f32.xlu0 %v438
    %v467 = vpop.xlane.xlu0 %466
    %468 = vadd.xlane.f32.xlu0 %v439
    %v469 = vpop.xlane.xlu0 %468
    %470 = vadd.xlane.f32.xlu0 %v440
    %v471 = vpop.xlane.xlu0 %470
    %472 = vadd.xlane.f32.xlu0 %v441
    %v473 = vpop.xlane.xlu0 %472
    %v474 = vsub.f32 %v362, %v443
    %v475 = vsub.f32 %v363, %v445
    %v476 = vsub.f32 %v364, %v447
    %v477 = vsub.f32 %v365, %v449
    %v478 = vsub.f32 %v366, %v451
    %v479 = vsub.f32 %v367, %v453
    %v480 = vsub.f32 %v368, %v455
    %v481 = vsub.f32 %v369, %v457
    %v482 = vsub.f32 %v370, %v459
    %v483 = vsub.f32 %v371, %v461
    %v484 = vsub.f32 %v372, %v463
    %v485 = vsub.f32 %v373, %v465
    %v486 = vsub.f32 %v374, %v467
    %v487 = vsub.f32 %v375, %v469
    %v488 = vsub.f32 %v376, %v471
    %v489 = vsub.f32 %v377, %v473
    %v490 = vsub.f32 0.0, %v474
    %v491 = vsub.f32 0.0, %v475
    %v492 = vsub.f32 0.0, %v476
    %v493 = vsub.f32 0.0, %v477
    %v494 = vsub.f32 0.0, %v478
    %v495 = vsub.f32 0.0, %v479
    %v496 = vsub.f32 0.0, %v480
    %v497 = vsub.f32 0.0, %v481
    %v498 = vsub.f32 0.0, %v482
    %v499 = vsub.f32 0.0, %v483
    %v500 = vsub.f32 0.0, %v484
    %v501 = vsub.f32 0.0, %v485
    %v502 = vsub.f32 0.0, %v486
    %v503 = vsub.f32 0.0, %v487
    %v504 = vsub.f32 0.0, %v488
    %v505 = vsub.f32 0.0, %v489
    %v506 = vmul.f32 %v490, 1.442695
    %v507 = vpow.pop %v506
    %v508 = vmul.f32 %v491, 1.442695
    %v509 = vpow.pop %v508
    %v510 = vmul.f32 %v492, 1.442695
    %v511 = vpow.pop %v510
    %v512 = vmul.f32 %v493, 1.442695
    %v513 = vpow.pop %v512
    %v514 = vmul.f32 %v494, 1.442695
    %v515 = vpow.pop %v514
    %v516 = vmul.f32 %v495, 1.442695
    %v517 = vpow.pop %v516
    %v518 = vmul.f32 %v496, 1.442695
    %v519 = vpow.pop %v518
    %v520 = vmul.f32 %v497, 1.442695
    %v521 = vpow.pop %v520
    %v522 = vmul.f32 %v498, 1.442695
    %v523 = vpow.pop %v522
    %v524 = vmul.f32 %v499, 1.442695
    %v525 = vpow.pop %v524
    %v526 = vmul.f32 %v500, 1.442695
    %v527 = vpow.pop %v526
    %v528 = vmul.f32 %v501, 1.442695
    %v529 = vpow.pop %v528
    %v530 = vmul.f32 %v502, 1.442695
    %v531 = vpow.pop %v530
    %v532 = vmul.f32 %v503, 1.442695
    %v533 = vpow.pop %v532
    %v534 = vmul.f32 %v504, 1.442695
    %v535 = vpow.pop %v534
    %v536 = vmul.f32 %v505, 1.442695
    %v537 = vpow.pop %v536
    %v538 = vsub.f32 1.0, %v507
    %v539 = vsub.f32 1.0, %v509
    %v540 = vsub.f32 1.0, %v511
    %v541 = vsub.f32 1.0, %v513
    %v542 = vsub.f32 1.0, %v515
    %v543 = vsub.f32 1.0, %v517
    %v544 = vsub.f32 1.0, %v519
    %v545 = vsub.f32 1.0, %v521
    %v546 = vsub.f32 1.0, %v523
    %v547 = vsub.f32 1.0, %v525
    %v548 = vsub.f32 1.0, %v527
    %v549 = vsub.f32 1.0, %v529
    %v550 = vsub.f32 1.0, %v531
    %v551 = vsub.f32 1.0, %v533
    %v552 = vsub.f32 1.0, %v535
    %v553 = vsub.f32 1.0, %v537
    %v554 = vmul.f32 %v538, %v474
    %v555 = vmul.f32 %v539, %v475
    %v556 = vmul.f32 %v540, %v476
    %v557 = vmul.f32 %v541, %v477
    %v558 = vmul.f32 %v542, %v478
    %v559 = vmul.f32 %v543, %v479
    %v560 = vmul.f32 %v544, %v480
    %v561 = vmul.f32 %v545, %v481
    %v562 = vmul.f32 %v546, %v482
    %v563 = vmul.f32 %v547, %v483
    %v564 = vmul.f32 %v548, %v484
    %v565 = vmul.f32 %v549, %v485
    %v566 = vmul.f32 %v550, %v486
    %v567 = vmul.f32 %v551, %v487
    %v568 = vmul.f32 %v552, %v488
    %v569 = vmul.f32 %v553, %v489
    %v571 = vlaneseq
    %v572 = vshrl.u32 %v571, 7
    %v573 = vsub.s32 0, %v572
    %v574 = vrot.slane %v151, %v573
    %v576 = vsel %vm202, %v574, 0.0
    %v577 = vsel %vm203, %v574, 0.0
    %v578 = vsel %vm204, %v574, 0.0
    %v579 = vsel %vm205, %v574, 0.0
    %v580 = vsel %vm206, %v574, 0.0
    %v581 = vsel %vm207, %v574, 0.0
    %v582 = vsel %vm208, %v574, 0.0
    %v583 = vsel %vm209, %v574, 0.0
    %v584 = vsel %vm210, %v574, 0.0
    %v585 = vsel %vm211, %v574, 0.0
    %v586 = vsel %vm212, %v574, 0.0
    %v587 = vsel %vm213, %v574, 0.0
    %v588 = vsel %vm214, %v574, 0.0
    %v589 = vsel %vm215, %v574, 0.0
    %v590 = vsel %vm216, %v574, 0.0
    %v591 = vsel %vm217, %v574, 0.0
    %592 = vadd.xlane.f32.xlu0 %v576
    %v593 = vpop.xlane.xlu0 %592
    %594 = vadd.xlane.f32.xlu0 %v577
    %v595 = vpop.xlane.xlu0 %594
    %596 = vadd.xlane.f32.xlu0 %v578
    %v597 = vpop.xlane.xlu0 %596
    %598 = vadd.xlane.f32.xlu0 %v579
    %v599 = vpop.xlane.xlu0 %598
    %600 = vadd.xlane.f32.xlu0 %v580
    %v601 = vpop.xlane.xlu0 %600
    %602 = vadd.xlane.f32.xlu0 %v581
    %v603 = vpop.xlane.xlu0 %602
    %604 = vadd.xlane.f32.xlu0 %v582
    %v605 = vpop.xlane.xlu0 %604
    %606 = vadd.xlane.f32.xlu0 %v583
    %v607 = vpop.xlane.xlu0 %606
    %608 = vadd.xlane.f32.xlu0 %v584
    %v609 = vpop.xlane.xlu0 %608
    %610 = vadd.xlane.f32.xlu0 %v585
    %v611 = vpop.xlane.xlu0 %610
    %612 = vadd.xlane.f32.xlu0 %v586
    %v613 = vpop.xlane.xlu0 %612
    %614 = vadd.xlane.f32.xlu0 %v587
    %v615 = vpop.xlane.xlu0 %614
    %616 = vadd.xlane.f32.xlu0 %v588
    %v617 = vpop.xlane.xlu0 %616
    %618 = vadd.xlane.f32.xlu0 %v589
    %v619 = vpop.xlane.xlu0 %618
    %620 = vadd.xlane.f32.xlu0 %v590
    %v621 = vpop.xlane.xlu0 %620
    %622 = vadd.xlane.f32.xlu0 %v591
    %v623 = vpop.xlane.xlu0 %622
    %vm624 = vcmp.eq.s32.totalorder %v153, 0
    %v625 = vsel %vm624, %v554, %v593
    %v626 = vsel %vm624, %v555, %v595
    %v627 = vsel %vm624, %v556, %v597
    %v628 = vsel %vm624, %v557, %v599
    %v629 = vsel %vm624, %v558, %v601
    %v630 = vsel %vm624, %v559, %v603
    %v631 = vsel %vm624, %v560, %v605
    %v632 = vsel %vm624, %v561, %v607
    %v633 = vsel %vm624, %v562, %v609
    %v634 = vsel %vm624, %v563, %v611
    %v635 = vsel %vm624, %v564, %v613
    %v636 = vsel %vm624, %v565, %v615
    %v637 = vsel %vm624, %v566, %v617
    %v638 = vsel %vm624, %v567, %v619
    %v639 = vsel %vm624, %v568, %v621
    %v640 = vsel %vm624, %v569, %v623
    %vm641 = vcmask 15360
    %642 = vst.msk [vmem:[%s99] sm:$0xff] %vm641, %v625
    %643 = vst.msk [vmem:[%s99 + $0x8] sm:$0xff] %vm641, %v626
    %644 = vst.msk [vmem:[%s99 + $0x10] sm:$0xff] %vm641, %v627
    %645 = vst.msk [vmem:[%s99 + $0x18] sm:$0xff] %vm641, %v628
    %646 = vst.msk [vmem:[%s99 + $0x20] sm:$0xff] %vm641, %v629
    %647 = vst.msk [vmem:[%s99 + $0x28] sm:$0xff] %vm641, %v630
    %648 = vst.msk [vmem:[%s99 + $0x30] sm:$0xff] %vm641, %v631
    %649 = vst.msk [vmem:[%s99 + $0x38] sm:$0xff] %vm641, %v632
    %650 = vst.msk [vmem:[%s99 + $0x40] sm:$0xff] %vm641, %v633
    %651 = vst.msk [vmem:[%s99 + $0x48] sm:$0xff] %vm641, %v634
    %652 = vst.msk [vmem:[%s99 + $0x50] sm:$0xff] %vm641, %v635
    %653 = vst.msk [vmem:[%s99 + $0x58] sm:$0xff] %vm641, %v636
    %654 = vst.msk [vmem:[%s99 + $0x60] sm:$0xff] %vm641, %v637
    %655 = vst.msk [vmem:[%s99 + $0x68] sm:$0xff] %vm641, %v638
    %656 = vst.msk [vmem:[%s99 + $0x70] sm:$0xff] %vm641, %v639
    %657 = vst.msk [vmem:[%s99 + $0x78] sm:$0xff] %vm641, %v640
    %v658 = vadd.f32 %v507, 1e-05
    %v659 = vadd.f32 %v509, 1e-05
    %v660 = vadd.f32 %v511, 1e-05
    %v661 = vadd.f32 %v513, 1e-05
    %v662 = vadd.f32 %v515, 1e-05
    %v663 = vadd.f32 %v517, 1e-05
    %v664 = vadd.f32 %v519, 1e-05
    %v665 = vadd.f32 %v521, 1e-05
    %v666 = vadd.f32 %v523, 1e-05
    %v667 = vadd.f32 %v525, 1e-05
    %v668 = vadd.f32 %v527, 1e-05
    %v669 = vadd.f32 %v529, 1e-05
    %v670 = vadd.f32 %v531, 1e-05
    %v671 = vadd.f32 %v533, 1e-05
    %v672 = vadd.f32 %v535, 1e-05
    %v673 = vadd.f32 %v537, 1e-05
    %v674 = vsub.f32 1.0, %v658
    %v675 = vsub.f32 1.0, %v659
    %v676 = vsub.f32 1.0, %v660
    %v677 = vsub.f32 1.0, %v661
    %v678 = vsub.f32 1.0, %v662
    %v679 = vsub.f32 1.0, %v663
    %v680 = vsub.f32 1.0, %v664
    %v681 = vsub.f32 1.0, %v665
    %v682 = vsub.f32 1.0, %v666
    %v683 = vsub.f32 1.0, %v667
    %v684 = vsub.f32 1.0, %v668
    %v685 = vsub.f32 1.0, %v669
    %v686 = vsub.f32 1.0, %v670
    %v687 = vsub.f32 1.0, %v671
    %v688 = vsub.f32 1.0, %v672
    %v689 = vsub.f32 1.0, %v673
    %v690 = vrcp.pop %v658
    %v691 = vmul.f32 %v674, %v690
    %v692 = vrcp.pop %v659
    %v693 = vmul.f32 %v675, %v692
    %v694 = vrcp.pop %v660
    %v695 = vmul.f32 %v676, %v694
    %v696 = vrcp.pop %v661
    %v697 = vmul.f32 %v677, %v696
    %v698 = vrcp.pop %v662
    %v699 = vmul.f32 %v678, %v698
    %v700 = vrcp.pop %v663
    %v701 = vmul.f32 %v679, %v700
    %v702 = vrcp.pop %v664
    %v703 = vmul.f32 %v680, %v702
    %v704 = vrcp.pop %v665
    %v705 = vmul.f32 %v681, %v704
    %v706 = vrcp.pop %v666
    %v707 = vmul.f32 %v682, %v706
    %v708 = vrcp.pop %v667
    %v709 = vmul.f32 %v683, %v708
    %v710 = vrcp.pop %v668
    %v711 = vmul.f32 %v684, %v710
    %v712 = vrcp.pop %v669
    %v713 = vmul.f32 %v685, %v712
    %v714 = vrcp.pop %v670
    %v715 = vmul.f32 %v686, %v714
    %v716 = vrcp.pop %v671
    %v717 = vmul.f32 %v687, %v716
    %v718 = vrcp.pop %v672
    %v719 = vmul.f32 %v688, %v718
    %v720 = vrcp.pop %v673
    %v721 = vmul.f32 %v689, %v720
    %v722 = vlog2.pop %v658
    %v723 = vmul.f32 %v722, 0.6931472
    %v724 = vlog2.pop %v659
    %v725 = vmul.f32 %v724, 0.6931472
    %v726 = vlog2.pop %v660
    %v727 = vmul.f32 %v726, 0.6931472
    %v728 = vlog2.pop %v661
    %v729 = vmul.f32 %v728, 0.6931472
    %v730 = vlog2.pop %v662
    %v731 = vmul.f32 %v730, 0.6931472
    %v732 = vlog2.pop %v663
    %v733 = vmul.f32 %v732, 0.6931472
    %v734 = vlog2.pop %v664
    %v735 = vmul.f32 %v734, 0.6931472
    %v736 = vlog2.pop %v665
    %v737 = vmul.f32 %v736, 0.6931472
    %v738 = vlog2.pop %v666
    %v739 = vmul.f32 %v738, 0.6931472
    %v740 = vlog2.pop %v667
    %v741 = vmul.f32 %v740, 0.6931472
    %v742 = vlog2.pop %v668
    %v743 = vmul.f32 %v742, 0.6931472
    %v744 = vlog2.pop %v669
    %v745 = vmul.f32 %v744, 0.6931472
    %v746 = vlog2.pop %v670
    %v747 = vmul.f32 %v746, 0.6931472
    %v748 = vlog2.pop %v671
    %v749 = vmul.f32 %v748, 0.6931472
    %v750 = vlog2.pop %v672
    %v751 = vmul.f32 %v750, 0.6931472
    %v752 = vlog2.pop %v673
    %v753 = vmul.f32 %v752, 0.6931472
    %v754 = vsub.f32 %v691, %v723
    %v755 = vsub.f32 %v693, %v725
    %v756 = vsub.f32 %v695, %v727
    %v757 = vsub.f32 %v697, %v729
    %v758 = vsub.f32 %v699, %v731
    %v759 = vsub.f32 %v701, %v733
    %v760 = vsub.f32 %v703, %v735
    %v761 = vsub.f32 %v705, %v737
    %v762 = vsub.f32 %v707, %v739
    %v763 = vsub.f32 %v709, %v741
    %v764 = vsub.f32 %v711, %v743
    %v765 = vsub.f32 %v713, %v745
    %v766 = vsub.f32 %v715, %v747
    %v767 = vsub.f32 %v717, %v749
    %v768 = vsub.f32 %v719, %v751
    %v769 = vsub.f32 %v721, %v753
    %v770 = vmul.f32 %v135, %v754
    %v771 = vmul.f32 %v136, %v755
    %v772 = vmul.f32 %v137, %v756
    %v773 = vmul.f32 %v138, %v757
    %v774 = vmul.f32 %v139, %v758
    %v775 = vmul.f32 %v140, %v759
    %v776 = vmul.f32 %v141, %v760
    %v777 = vmul.f32 %v142, %v761
    %v778 = vmul.f32 %v143, %v762
    %v779 = vmul.f32 %v144, %v763
    %v780 = vmul.f32 %v145, %v764
    %v781 = vmul.f32 %v146, %v765
    %v782 = vmul.f32 %v147, %v766
    %v783 = vmul.f32 %v148, %v767
    %v784 = vmul.f32 %v149, %v768
    %v785 = vmul.f32 %v150, %v769
    %v786 = vmul.f32 %v674, %v658
    %v787 = vmul.f32 %v675, %v659
    %v788 = vmul.f32 %v676, %v660
    %v789 = vmul.f32 %v677, %v661
    %v790 = vmul.f32 %v678, %v662
    %v791 = vmul.f32 %v679, %v663
    %v792 = vmul.f32 %v680, %v664
    %v793 = vmul.f32 %v681, %v665
    %v794 = vmul.f32 %v682, %v666
    %v795 = vmul.f32 %v683, %v667
    %v796 = vmul.f32 %v684, %v668
    %v797 = vmul.f32 %v685, %v669
    %v798 = vmul.f32 %v686, %v670
    %v799 = vmul.f32 %v687, %v671
    %v800 = vmul.f32 %v688, %v672
    %v801 = vmul.f32 %v689, %v673
    %v802 = vmul.f32 %v786, %v770
    %v803 = vmul.f32 %v787, %v771
    %v804 = vmul.f32 %v788, %v772
    %v805 = vmul.f32 %v789, %v773
    %v806 = vmul.f32 %v790, %v774
    %v807 = vmul.f32 %v791, %v775
    %v808 = vmul.f32 %v792, %v776
    %v809 = vmul.f32 %v793, %v777
    %v810 = vmul.f32 %v794, %v778
    %v811 = vmul.f32 %v795, %v779
    %v812 = vmul.f32 %v796, %v780
    %v813 = vmul.f32 %v797, %v781
    %v814 = vmul.f32 %v798, %v782
    %v815 = vmul.f32 %v799, %v783
    %v816 = vmul.f32 %v800, %v784
    %v817 = vmul.f32 %v801, %v785
    %819 = vset.pattern.permute.xlu0 0
    %820 = vperm.xlu0 %819, %v802
    %v821 = vpop.permute.xlu0 %820
    %824 = vset.pattern.permute.xlu0 0
    %825 = vperm.xlu0 %824, %v803
    %v826 = vpop.permute.xlu0 %825
    %829 = vset.pattern.permute.xlu0 0
    %830 = vperm.xlu0 %829, %v804
    %v831 = vpop.permute.xlu0 %830
    %834 = vset.pattern.permute.xlu0 0
    %835 = vperm.xlu0 %834, %v805
    %v836 = vpop.permute.xlu0 %835
    %839 = vset.pattern.permute.xlu0 0
    %840 = vperm.xlu0 %839, %v806
    %v841 = vpop.permute.xlu0 %840
    %844 = vset.pattern.permute.xlu0 0
    %845 = vperm.xlu0 %844, %v807
    %v846 = vpop.permute.xlu0 %845
    %849 = vset.pattern.permute.xlu0 0
    %850 = vperm.xlu0 %849, %v808
    %v851 = vpop.permute.xlu0 %850
    %854 = vset.pattern.permute.xlu0 0
    %855 = vperm.xlu0 %854, %v809
    %v856 = vpop.permute.xlu0 %855
    %859 = vset.pattern.permute.xlu0 0
    %860 = vperm.xlu0 %859, %v810
    %v861 = vpop.permute.xlu0 %860
    %864 = vset.pattern.permute.xlu0 0
    %865 = vperm.xlu0 %864, %v811
    %v866 = vpop.permute.xlu0 %865
    %869 = vset.pattern.permute.xlu0 0
    %870 = vperm.xlu0 %869, %v812
    %v871 = vpop.permute.xlu0 %870
    %874 = vset.pattern.permute.xlu0 0
    %875 = vperm.xlu0 %874, %v813
    %v876 = vpop.permute.xlu0 %875
    %879 = vset.pattern.permute.xlu0 0
    %880 = vperm.xlu0 %879, %v814
    %v881 = vpop.permute.xlu0 %880
    %884 = vset.pattern.permute.xlu0 0
    %885 = vperm.xlu0 %884, %v815
    %v886 = vpop.permute.xlu0 %885
    %889 = vset.pattern.permute.xlu0 0
    %890 = vperm.xlu0 %889, %v816
    %v891 = vpop.permute.xlu0 %890
    %894 = vset.pattern.permute.xlu0 0
    %895 = vperm.xlu0 %894, %v817
    %v896 = vpop.permute.xlu0 %895
    %v898 = vsel %vm202, %v821, 0.0
    %v899 = vsel %vm203, %v826, 0.0
    %v900 = vsel %vm204, %v831, 0.0
    %v901 = vsel %vm205, %v836, 0.0
    %v902 = vsel %vm206, %v841, 0.0
    %v903 = vsel %vm207, %v846, 0.0
    %v904 = vsel %vm208, %v851, 0.0
    %v905 = vsel %vm209, %v856, 0.0
    %v906 = vsel %vm210, %v861, 0.0
    %v907 = vsel %vm211, %v866, 0.0
    %v908 = vsel %vm212, %v871, 0.0
    %v909 = vsel %vm213, %v876, 0.0
    %v910 = vsel %vm214, %v881, 0.0
    %v911 = vsel %vm215, %v886, 0.0
    %v912 = vsel %vm216, %v891, 0.0
    %v913 = vsel %vm217, %v896, 0.0
    %v914 = vadd.f32 %v898, %v899
    %v915 = vadd.f32 %v914, %v900
    %v916 = vadd.f32 %v915, %v901
    %v917 = vadd.f32 %v916, %v902
    %v918 = vadd.f32 %v917, %v903
    %v919 = vadd.f32 %v918, %v904
    %v920 = vadd.f32 %v919, %v905
    %v921 = vadd.f32 %v920, %v906
    %v922 = vadd.f32 %v921, %v907
    %v923 = vadd.f32 %v922, %v908
    %v924 = vadd.f32 %v923, %v909
    %v925 = vadd.f32 %v924, %v910
    %v926 = vadd.f32 %v925, %v911
    %v927 = vadd.f32 %v926, %v912
    %v928 = vadd.f32 %v927, %v913
    %v929 = vrot.slane %v928, 4
    %v930 = vadd.f32 %v928, %v929
    %v931 = vrot.slane %v930, 2
    %v932 = vadd.f32 %v930, %v931
    %v933 = vrot.slane %v932, 1
    %v934 = vadd.f32 %v932, %v933
    %s935 = sadd.s32 0, 0
    %s936 = smul.u32 %s935, 128
    %v937 = vlaneseq
    %v938 = vshrl.u32 %v937, 7
    %v939 = vadd.s32 %v938, 8
    %v940 = vadd.s32 %v938, 16
    %v941 = vadd.s32 %v938, 24
    %v942 = vadd.s32 %v938, 32
    %v943 = vadd.s32 %v938, 40
    %v944 = vadd.s32 %v938, 48
    %v945 = vadd.s32 %v938, 56
    %v946 = vadd.s32 %v938, 64
    %v947 = vadd.s32 %v938, 72
    %v948 = vadd.s32 %v938, 80
    %v949 = vadd.s32 %v938, 88
    %v950 = vadd.s32 %v938, 96
    %v951 = vadd.s32 %v938, 104
    %v952 = vadd.s32 %v938, 112
    %v953 = vadd.s32 %v938, 120
    %v954 = vstv %s936
    %v955 = vadd.s32 %v954, %v938
    %v956 = vadd.s32 %v954, %v939
    %v957 = vadd.s32 %v954, %v940
    %v958 = vadd.s32 %v954, %v941
    %v959 = vadd.s32 %v954, %v942
    %v960 = vadd.s32 %v954, %v943
    %v961 = vadd.s32 %v954, %v944
    %v962 = vadd.s32 %v954, %v945
    %v963 = vadd.s32 %v954, %v946
    %v964 = vadd.s32 %v954, %v947
    %v965 = vadd.s32 %v954, %v948
    %v966 = vadd.s32 %v954, %v949
    %v967 = vadd.s32 %v954, %v950
    %v968 = vadd.s32 %v954, %v951
    %v969 = vadd.s32 %v954, %v952
    %v970 = vadd.s32 %v954, %v953
    %vm971 = vcmp.lt.s32.totalorder %v955, 128
    %vm972 = vcmp.lt.s32.totalorder %v956, 128
    %vm973 = vcmp.lt.s32.totalorder %v957, 128
    %vm974 = vcmp.lt.s32.totalorder %v958, 128
    %vm975 = vcmp.lt.s32.totalorder %v959, 128
    %vm976 = vcmp.lt.s32.totalorder %v960, 128
    %vm977 = vcmp.lt.s32.totalorder %v961, 128
    %vm978 = vcmp.lt.s32.totalorder %v962, 128
    %vm979 = vcmp.lt.s32.totalorder %v963, 128
    %vm980 = vcmp.lt.s32.totalorder %v964, 128
    %vm981 = vcmp.lt.s32.totalorder %v965, 128
    %vm982 = vcmp.lt.s32.totalorder %v966, 128
    %vm983 = vcmp.lt.s32.totalorder %v967, 128
    %vm984 = vcmp.lt.s32.totalorder %v968, 128
    %vm985 = vcmp.lt.s32.totalorder %v969, 128
    %vm986 = vcmp.lt.s32.totalorder %v970, 128
    %v987 = vsel %vm971, 1, 0
    %v988 = vsel %vm972, 1, 0
    %v989 = vsel %vm973, 1, 0
    %v990 = vsel %vm974, 1, 0
    %v991 = vsel %vm975, 1, 0
    %v992 = vsel %vm976, 1, 0
    %v993 = vsel %vm977, 1, 0
    %v994 = vsel %vm978, 1, 0
    %v995 = vsel %vm979, 1, 0
    %v996 = vsel %vm980, 1, 0
    %v997 = vsel %vm981, 1, 0
    %v998 = vsel %vm982, 1, 0
    %v999 = vsel %vm983, 1, 0
    %v1000 = vsel %vm984, 1, 0
    %v1001 = vsel %vm985, 1, 0
    %v1002 = vsel %vm986, 1, 0
    %v1003 = vcvt.s32.f32 %v987
    %v1004 = vcvt.s32.f32 %v988
    %v1005 = vcvt.s32.f32 %v989
    %v1006 = vcvt.s32.f32 %v990
    %v1007 = vcvt.s32.f32 %v991
    %v1008 = vcvt.s32.f32 %v992
    %v1009 = vcvt.s32.f32 %v993
    %v1010 = vcvt.s32.f32 %v994
    %v1011 = vcvt.s32.f32 %v995
    %v1012 = vcvt.s32.f32 %v996
    %v1013 = vcvt.s32.f32 %v997
    %v1014 = vcvt.s32.f32 %v998
    %v1015 = vcvt.s32.f32 %v999
    %v1016 = vcvt.s32.f32 %v1000
    %v1017 = vcvt.s32.f32 %v1001
    %v1018 = vcvt.s32.f32 %v1002
    %v1019 = vmul.f32 %v658, %v770
    %v1020 = vmul.f32 %v659, %v771
    %v1021 = vmul.f32 %v660, %v772
    %v1022 = vmul.f32 %v661, %v773
    %v1023 = vmul.f32 %v662, %v774
    %v1024 = vmul.f32 %v663, %v775
    %v1025 = vmul.f32 %v664, %v776
    %v1026 = vmul.f32 %v665, %v777
    %v1027 = vmul.f32 %v666, %v778
    %v1028 = vmul.f32 %v667, %v779
    %v1029 = vmul.f32 %v668, %v780
    %v1030 = vmul.f32 %v669, %v781
    %v1031 = vmul.f32 %v670, %v782
    %v1032 = vmul.f32 %v671, %v783
    %v1033 = vmul.f32 %v672, %v784
    %v1034 = vmul.f32 %v673, %v785
    %v1035 = vmul.f32 %v1019, %v1003
    %v1036 = vmul.f32 %v1020, %v1004
    %v1037 = vmul.f32 %v1021, %v1005
    %v1038 = vmul.f32 %v1022, %v1006
    %v1039 = vmul.f32 %v1023, %v1007
    %v1040 = vmul.f32 %v1024, %v1008
    %v1041 = vmul.f32 %v1025, %v1009
    %v1042 = vmul.f32 %v1026, %v1010
    %v1043 = vmul.f32 %v1027, %v1011
    %v1044 = vmul.f32 %v1028, %v1012
    %v1045 = vmul.f32 %v1029, %v1013
    %v1046 = vmul.f32 %v1030, %v1014
    %v1047 = vmul.f32 %v1031, %v1015
    %v1048 = vmul.f32 %v1032, %v1016
    %v1049 = vmul.f32 %v1033, %v1017
    %v1050 = vmul.f32 %v1034, %v1018
    %1052 = vset.pattern.permute.xlu0 0
    %1053 = vperm.xlu0 %1052, %v1035
    %v1054 = vpop.permute.xlu0 %1053
    %1057 = vset.pattern.permute.xlu0 0
    %1058 = vperm.xlu0 %1057, %v1036
    %v1059 = vpop.permute.xlu0 %1058
    %1062 = vset.pattern.permute.xlu0 0
    %1063 = vperm.xlu0 %1062, %v1037
    %v1064 = vpop.permute.xlu0 %1063
    %1067 = vset.pattern.permute.xlu0 0
    %1068 = vperm.xlu0 %1067, %v1038
    %v1069 = vpop.permute.xlu0 %1068
    %1072 = vset.pattern.permute.xlu0 0
    %1073 = vperm.xlu0 %1072, %v1039
    %v1074 = vpop.permute.xlu0 %1073
    %1077 = vset.pattern.permute.xlu0 0
    %1078 = vperm.xlu0 %1077, %v1040
    %v1079 = vpop.permute.xlu0 %1078
    %1082 = vset.pattern.permute.xlu0 0
    %1083 = vperm.xlu0 %1082, %v1041
    %v1084 = vpop.permute.xlu0 %1083
    %1087 = vset.pattern.permute.xlu0 0
    %1088 = vperm.xlu0 %1087, %v1042
    %v1089 = vpop.permute.xlu0 %1088
    %1092 = vset.pattern.permute.xlu0 0
    %1093 = vperm.xlu0 %1092, %v1043
    %v1094 = vpop.permute.xlu0 %1093
    %1097 = vset.pattern.permute.xlu0 0
    %1098 = vperm.xlu0 %1097, %v1044
    %v1099 = vpop.permute.xlu0 %1098
    %1102 = vset.pattern.permute.xlu0 0
    %1103 = vperm.xlu0 %1102, %v1045
    %v1104 = vpop.permute.xlu0 %1103
    %1107 = vset.pattern.permute.xlu0 0
    %1108 = vperm.xlu0 %1107, %v1046
    %v1109 = vpop.permute.xlu0 %1108
    %1112 = vset.pattern.permute.xlu0 0
    %1113 = vperm.xlu0 %1112, %v1047
    %v1114 = vpop.permute.xlu0 %1113
    %1117 = vset.pattern.permute.xlu0 0
    %1118 = vperm.xlu0 %1117, %v1048
    %v1119 = vpop.permute.xlu0 %1118
    %1122 = vset.pattern.permute.xlu0 0
    %1123 = vperm.xlu0 %1122, %v1049
    %v1124 = vpop.permute.xlu0 %1123
    %1127 = vset.pattern.permute.xlu0 0
    %1128 = vperm.xlu0 %1127, %v1050
    %v1129 = vpop.permute.xlu0 %1128
    %v1131 = vsel %vm202, %v1054, 0.0
    %v1132 = vsel %vm203, %v1059, 0.0
    %v1133 = vsel %vm204, %v1064, 0.0
    %v1134 = vsel %vm205, %v1069, 0.0
    %v1135 = vsel %vm206, %v1074, 0.0
    %v1136 = vsel %vm207, %v1079, 0.0
    %v1137 = vsel %vm208, %v1084, 0.0
    %v1138 = vsel %vm209, %v1089, 0.0
    %v1139 = vsel %vm210, %v1094, 0.0
    %v1140 = vsel %vm211, %v1099, 0.0
    %v1141 = vsel %vm212, %v1104, 0.0
    %v1142 = vsel %vm213, %v1109, 0.0
    %v1143 = vsel %vm214, %v1114, 0.0
    %v1144 = vsel %vm215, %v1119, 0.0
    %v1145 = vsel %vm216, %v1124, 0.0
    %v1146 = vsel %vm217, %v1129, 0.0
    %v1147 = vpack.c.bf16 %v1132, %v1131
    %v1148 = vpack.c.bf16 %v1134, %v1133
    %v1149 = vpack.c.bf16 %v1136, %v1135
    %v1150 = vpack.c.bf16 %v1138, %v1137
    %v1151 = vpack.c.bf16 %v1140, %v1139
    %v1152 = vpack.c.bf16 %v1142, %v1141
    %v1153 = vpack.c.bf16 %v1144, %v1143
    %v1154 = vpack.c.bf16 %v1146, %v1145
    %v1155 = vpack.c.bf16 %v411, %v410
    %v1156 = vpack.c.bf16 %v413, %v412
    %v1157 = vpack.c.bf16 %v415, %v414
    %v1158 = vpack.c.bf16 %v417, %v416
    %v1159 = vpack.c.bf16 %v419, %v418
    %v1160 = vpack.c.bf16 %v421, %v420
    %v1161 = vpack.c.bf16 %v423, %v422
    %v1162 = vpack.c.bf16 %v425, %v424
    %1163 = vxpose.xlu0.c.b16.start [1/8] %v1147, 128
    %1164 = vxpose.xlu0.c.b16.cont [2/8] %v1148, 128
    %1165 = vxpose.xlu0.c.b16.cont [3/8] %v1149, 128
    %1166 = vxpose.xlu0.c.b16.cont [4/8] %v1150, 128
    %1167 = vxpose.xlu0.c.b16.cont [5/8] %v1151, 128
    %1168 = vxpose.xlu0.c.b16.cont [6/8] %v1152, 128
    %1169 = vxpose.xlu0.c.b16.cont [7/8] %v1153, 128
    %1170 = vxpose.xlu0.c.b16.end [8/8] %v1154, 128
    %v1171 = vpop.trf.xlu0
    %v1172 = vpop.trf.xlu0
    %v1173 = vpop.trf.xlu0
    %v1174 = vpop.trf.xlu0
    %v1175 = vpop.trf.xlu0
    %v1176 = vpop.trf.xlu0
    %v1177 = vpop.trf.xlu0
    %v1178 = vpop.trf.xlu0
    %1179 = vmatprep.subr.bf16.mxu0 0
    %1180 = vmatpush1.bf16.msra.mxu0 %v1155
    %1181 = vmatprep.subr.bf16.mxu0 0
    %1182 = vmatpush1.bf16.msra.mxu0 %v1156
    %1183 = vmatprep.subr.bf16.mxu0 0
    %1184 = vmatpush1.bf16.msra.mxu0 %v1157
    %1185 = vmatprep.subr.bf16.mxu0 0
    %1186 = vmatpush1.bf16.msra.mxu0 %v1158
    %1187 = vmatprep.subr.bf16.mxu0 0
    %1188 = vmatpush1.bf16.msra.mxu0 %v1159
    %1189 = vmatprep.subr.bf16.mxu0 0
    %1190 = vmatpush1.bf16.msra.mxu0 %v1160
    %1191 = vmatprep.subr.bf16.mxu0 0
    %1192 = vmatpush1.bf16.msra.mxu0 %v1161
    %1193 = vmatprep.subr.bf16.mxu0 0
    %1194 = vmatpush1.bf16.msra.mxu0 %v1162
    %1195 = vmatprep.subr.bf16.mxu0 0
    %1196 = vmatpush1.bf16.msra.mxu0 0
    %1197 = vmatprep.subr.bf16.mxu0 0
    %1198 = vmatpush1.bf16.msra.mxu0 0
    %1199 = vmatprep.subr.bf16.mxu0 0
    %1200 = vmatpush1.bf16.msra.mxu0 0
    %1201 = vmatprep.subr.bf16.mxu0 0
    %1202 = vmatpush1.bf16.msra.mxu0 0
    %1203 = vmatprep.subr.bf16.mxu0 0
    %1204 = vmatpush1.bf16.msra.mxu0 0
    %1205 = vmatprep.subr.bf16.mxu0 0
    %1206 = vmatpush1.bf16.msra.mxu0 0
    %1207 = vmatprep.subr.bf16.mxu0 0
    %1208 = vmatpush1.bf16.msra.mxu0 0
    %1209 = vmatprep.subr.bf16.mxu0 0
    %1210 = vmatpush1.bf16.msra.mxu0 0
    %1211 = vmatprep.mubr.bf16.mxu0 0
    %1212 = vmatmul.mubr.bf16.gmra.mrb[0].mxu0 %v1171
    %v1213 = vpop.f32.mrb[0].mxu0
    %v1214 = vadd.f32 0.0, %v1213
    %v1215 = vpop.f32.mrb[0].mxu0
    %v1216 = vpop.f32.mrb[0].mxu0
    %v1217 = vadd.f32 0.0, %v1216
    %v1218 = vpop.f32.mrb[0].mxu0
    %1219 = vmatprep.mubr.bf16.mxu0 0
    %1220 = vmatmul.mubr.bf16.gmra.mrb[0].mxu0 %v1172
    %v1221 = vpop.f32.mrb[0].mxu0
    %v1222 = vadd.f32 0.0, %v1221
    %v1223 = vpop.f32.mrb[0].mxu0
    %v1224 = vpop.f32.mrb[0].mxu0
    %v1225 = vadd.f32 0.0, %v1224
    %v1226 = vpop.f32.mrb[0].mxu0
    %1227 = vmatprep.mubr.bf16.mxu0 0
    %1228 = vmatmul.mubr.bf16.gmra.mrb[0].mxu0 %v1173
    %v1229 = vpop.f32.mrb[0].mxu0
    %v1230 = vadd.f32 0.0, %v1229
    %v1231 = vpop.f32.mrb[0].mxu0
    %v1232 = vpop.f32.mrb[0].mxu0
    %v1233 = vadd.f32 0.0, %v1232
    %v1234 = vpop.f32.mrb[0].mxu0
    %1235 = vmatprep.mubr.bf16.mxu0 0
    %1236 = vmatmul.mubr.bf16.gmra.mrb[0].mxu0 %v1174
    %v1237 = vpop.f32.mrb[0].mxu0
    %v1238 = vadd.f32 0.0, %v1237
    %v1239 = vpop.f32.mrb[0].mxu0
    %v1240 = vpop.f32.mrb[0].mxu0
    %v1241 = vadd.f32 0.0, %v1240
    %v1242 = vpop.f32.mrb[0].mxu0
    %1243 = vmatprep.mubr.bf16.mxu0 0
    %1244 = vmatmul.mubr.bf16.gmra.mrb[0].mxu0 %v1175
    %v1245 = vpop.f32.mrb[0].mxu0
    %v1246 = vadd.f32 0.0, %v1245
    %v1247 = vpop.f32.mrb[0].mxu0
    %v1248 = vpop.f32.mrb[0].mxu0
    %v1249 = vadd.f32 0.0, %v1248
    %v1250 = vpop.f32.mrb[0].mxu0
    %1251 = vmatprep.mubr.bf16.mxu0 0
    %1252 = vmatmul.mubr.bf16.gmra.mrb[0].mxu0 %v1176
    %v1253 = vpop.f32.mrb[0].mxu0
    %v1254 = vadd.f32 0.0, %v1253
    %v1255 = vpop.f32.mrb[0].mxu0
    %v1256 = vpop.f32.mrb[0].mxu0
    %v1257 = vadd.f32 0.0, %v1256
    %v1258 = vpop.f32.mrb[0].mxu0
    %1259 = vmatprep.mubr.bf16.mxu0 0
    %1260 = vmatmul.mubr.bf16.gmra.mrb[0].mxu0 %v1177
    %v1261 = vpop.f32.mrb[0].mxu0
    %v1262 = vadd.f32 0.0, %v1261
    %v1263 = vpop.f32.mrb[0].mxu0
    %v1264 = vpop.f32.mrb[0].mxu0
    %v1265 = vadd.f32 0.0, %v1264
    %v1266 = vpop.f32.mrb[0].mxu0
    %1267 = vmatprep.mubr.bf16.mxu0 0
    %1268 = vmatmul.mubr.bf16.gmra.mrb[0].mxu0 %v1178
    %v1269 = vpop.f32.mrb[0].mxu0
    %v1270 = vadd.f32 0.0, %v1269
    %v1271 = vpop.f32.mrb[0].mxu0
    %v1272 = vpop.f32.mrb[0].mxu0
    %v1273 = vadd.f32 0.0, %v1272
    %v1274 = vpop.f32.mrb[0].mxu0
    %1275 = vdwg.mxu0
    %p1276 = scmp.eq.s32.totalorder 0, 0
    // Predicated region
    $region18: #{tpu_custom_call.1} parent=1 // pred_check
      %p1277 = pneg %p1276
    $region19: #{tpu_custom_call.1} parent=1 // pred_check_branch
      %1279 = sbr.rel (%p1277) target = $region21
    $region20: #{tpu_custom_call.1} parent=1 // pred_region
      %1280 = vst [vmem:[#allocation2] sm:$0x1] 0.0
      %1281 = vst [vmem:[#allocation4] sm:$0xff] 0.0
      %1282 = vst [vmem:[#allocation4 + $0x8] sm:$0xff] 0.0
      %1283 = vst [vmem:[#allocation4 + $0x10] sm:$0xff] 0.0
      %1284 = vst [vmem:[#allocation4 + $0x18] sm:$0xff] 0.0
      %1285 = vst [vmem:[#allocation4 + $0x20] sm:$0xff] 0.0
      %1286 = vst [vmem:[#allocation4 + $0x28] sm:$0xff] 0.0
      %1287 = vst [vmem:[#allocation4 + $0x30] sm:$0xff] 0.0
      %1288 = vst [vmem:[#allocation4 + $0x38] sm:$0xff] 0.0
      %1289 = vst [vmem:[#allocation4 + $0x40] sm:$0xff] 0.0
      %1290 = vst [vmem:[#allocation4 + $0x48] sm:$0xff] 0.0
      %1291 = vst [vmem:[#allocation4 + $0x50] sm:$0xff] 0.0
      %1292 = vst [vmem:[#allocation4 + $0x58] sm:$0xff] 0.0
      %1293 = vst [vmem:[#allocation4 + $0x60] sm:$0xff] 0.0
      %1294 = vst [vmem:[#allocation4 + $0x68] sm:$0xff] 0.0
      %1295 = vst [vmem:[#allocation4 + $0x70] sm:$0xff] 0.0
      %1296 = vst [vmem:[#allocation4 + $0x78] sm:$0xff] 0.0
    $region21: #{tpu_custom_call.1} parent=1 // pred_fallthru
      _
    %v1297 = vld [vmem:[#allocation2] sm:$0x1]
    %v1298 = vadd.f32 %v1297, %v934
    %1299 = vst [vmem:[#allocation2] sm:$0x1] %v1298
    %v1300 = vld [vmem:[#allocation4] sm:$0xff]
    %v1301 = vld [vmem:[#allocation4 + $0x8] sm:$0xff]
    %v1302 = vld [vmem:[#allocation4 + $0x10] sm:$0xff]
    %v1303 = vld [vmem:[#allocation4 + $0x18] sm:$0xff]
    %v1304 = vld [vmem:[#allocation4 + $0x20] sm:$0xff]
    %v1305 = vld [vmem:[#allocation4 + $0x28] sm:$0xff]
    %v1306 = vld [vmem:[#allocation4 + $0x30] sm:$0xff]
    %v1307 = vld [vmem:[#allocation4 + $0x38] sm:$0xff]
    %v1308 = vld [vmem:[#allocation4 + $0x40] sm:$0xff]
    %v1309 = vld [vmem:[#allocation4 + $0x48] sm:$0xff]
    %v1310 = vld [vmem:[#allocation4 + $0x50] sm:$0xff]
    %v1311 = vld [vmem:[#allocation4 + $0x58] sm:$0xff]
    %v1312 = vld [vmem:[#allocation4 + $0x60] sm:$0xff]
    %v1313 = vld [vmem:[#allocation4 + $0x68] sm:$0xff]
    %v1314 = vld [vmem:[#allocation4 + $0x70] sm:$0xff]
    %v1315 = vld [vmem:[#allocation4 + $0x78] sm:$0xff]
    %v1316 = vadd.f32 %v1300, %v1214
    %v1317 = vadd.f32 %v1301, %v1217
    %v1318 = vadd.f32 %v1302, %v1222
    %v1319 = vadd.f32 %v1303, %v1225
    %v1320 = vadd.f32 %v1304, %v1230
    %v1321 = vadd.f32 %v1305, %v1233
    %v1322 = vadd.f32 %v1306, %v1238
    %v1323 = vadd.f32 %v1307, %v1241
    %v1324 = vadd.f32 %v1308, %v1246
    %v1325 = vadd.f32 %v1309, %v1249
    %v1326 = vadd.f32 %v1310, %v1254
    %v1327 = vadd.f32 %v1311, %v1257
    %v1328 = vadd.f32 %v1312, %v1262
    %v1329 = vadd.f32 %v1313, %v1265
    %v1330 = vadd.f32 %v1314, %v1270
    %v1331 = vadd.f32 %v1315, %v1273
    %1332 = vst [vmem:[#allocation4] sm:$0xff] %v1316
    %1333 = vst [vmem:[#allocation4 + $0x8] sm:$0xff] %v1317
    %1334 = vst [vmem:[#allocation4 + $0x10] sm:$0xff] %v1318
    %1335 = vst [vmem:[#allocation4 + $0x18] sm:$0xff] %v1319
    %1336 = vst [vmem:[#allocation4 + $0x20] sm:$0xff] %v1320
    %1337 = vst [vmem:[#allocation4 + $0x28] sm:$0xff] %v1321
    %1338 = vst [vmem:[#allocation4 + $0x30] sm:$0xff] %v1322
    %1339 = vst [vmem:[#allocation4 + $0x38] sm:$0xff] %v1323
    %1340 = vst [vmem:[#allocation4 + $0x40] sm:$0xff] %v1324
    %1341 = vst [vmem:[#allocation4 + $0x48] sm:$0xff] %v1325
    %1342 = vst [vmem:[#allocation4 + $0x50] sm:$0xff] %v1326
    %1343 = vst [vmem:[#allocation4 + $0x58] sm:$0xff] %v1327
    %1344 = vst [vmem:[#allocation4 + $0x60] sm:$0xff] %v1328
    %1345 = vst [vmem:[#allocation4 + $0x68] sm:$0xff] %v1329
    %1346 = vst [vmem:[#allocation4 + $0x70] sm:$0xff] %v1330
    %1347 = vst [vmem:[#allocation4 + $0x78] sm:$0xff] %v1331
    %s1348 = sadd.s32 0, 0
    %s1349 = smul.u32 16, %s1348
    %p1350 = scmp.lt.s32.totalorder %s1349, 15
    %s1351 = scalar_select %p1350, %s1349, 15
    %s1352 = smul.addr %s1351, 8
    %s1353 = scalar_lea.vmem %s4, %s1352
    // Predicated region
    $region22: #{tpu_custom_call.1} parent=1 // pred_check
      _
    $region23: #{tpu_custom_call.1} parent=1 // pred_check_branch
      %1355 = sbr.rel (0) target = $region25
    $region24: #{tpu_custom_call.1} parent=1 // pred_region
      %s1356 = sadd.s32 0, 0
      %s1357 = smul.u32 16, %s1356
    $region25: #{tpu_custom_call.1} parent=1 // pred_fallthru
      _
    // Predicated region
    $region26: #{tpu_custom_call.1} parent=1 // pred_check
      _
    $region27: #{tpu_custom_call.1} parent=1 // pred_check_branch
      %1359 = sbr.rel (0) target = $region29
    $region28: #{tpu_custom_call.1} parent=1 // pred_region
      %s1361 = ssub.s32 16, 16
      %1362 = vsyncadd [#allocation3], %s1361
      %s1364 = sshll.u32 [#allocation2], 4
      %s1365 = int_to_ptr.vmem [resolvable:$true] %s1364
      %1367 = dma.vmem_to_hbm [thread:$0]  %s1365, 16, %s5, [#allocation3]
    $region29: #{tpu_custom_call.1} parent=1 // pred_fallthru
      _
    // Predicated region
    $region30: #{tpu_custom_call.1} parent=1 // pred_check
      _
    $region31: #{tpu_custom_call.1} parent=1 // pred_check_branch
      %1369 = sbr.rel (0) target = $region33
    $region32: #{tpu_custom_call.1} parent=1 // pred_region
      %s1371 = ssub.s32 2048, 2048
      %1372 = vsyncadd [#allocation5], %s1371
      %s1373 = sshll.u32 [#allocation4], 4
      %s1374 = int_to_ptr.vmem [resolvable:$true] %s1373
      %1379 = dma.vmem_to_hbm [thread:$0]  %s1374, 2048, %s6, [#allocation5], 128, 128, 8
    $region33: #{tpu_custom_call.1} parent=1 // pred_fallthru
      _
    // Predicated region
    $region34: #{tpu_custom_call.1} parent=1 // pred_check
      _
    $region35: #{tpu_custom_call.1} parent=1 // pred_check_branch
      %1381 = sbr.rel (0) target = $region37
    $region36: #{tpu_custom_call.1} parent=1 // pred_region
      %s1382 = sadd.s32 0, 0
      %s1383 = smul.u32 16, %s1382
      %p1384 = scmp.lt.s32.totalorder %s1383, 15
      %s1385 = scalar_select %p1384, %s1383, 15
      %s1386 = smul.addr %s1385, 8
      %s1387 = scalar_lea.vmem %s4, %s1386
    $region37: #{tpu_custom_call.1} parent=1 // pred_fallthru
      _
    // Predicated region
    $region38: #{tpu_custom_call.1} parent=1 // pred_check
      _
    $region39: #{tpu_custom_call.1} parent=1 // pred_check_branch
      %1389 = sbr.rel (0) target = $region41
    $region40: #{tpu_custom_call.1} parent=1 // pred_region
      %1390 = dma.done [#allocation3], 16
    $region41: #{tpu_custom_call.1} parent=1 // pred_fallthru
      _
    // Predicated region
    $region42: #{tpu_custom_call.1} parent=1 // pred_check
      _
    $region43: #{tpu_custom_call.1} parent=1 // pred_check_branch
      %1392 = sbr.rel (0) target = $region45
    $region44: #{tpu_custom_call.1} parent=1 // pred_region
      %1393 = dma.done [#allocation5], 2048
    $region45: #{tpu_custom_call.1} parent=1 // pred_fallthru
      _
    %1394 = vsyncpa [#allocation3], 1
    %1395 = vsyncpa [#allocation5], 1

</llo_original>
